<compile_context>
chip_gen: v6e
topology: v6e:2x2x1
jax: 0.10.0
libtpu: 0.0.40
codegen_flags: <defaults>
</compile_context>

<pallas_src>
import functools

import jax
import jax.numpy as jnp
from jax import lax
from jax.experimental import pallas as pl
from jax.experimental.pallas import tpu as pltpu

EPS = 1e-5  # nn.BatchNorm2d default eps

_ROW_TILES = (512, 256, 128, 64, 32, 16, 8)
_K_TILES = (512, 384, 256, 128)
_N_TILES = (256, 128)
_C_TILES = (512, 256, 128)


def _pick_tile(n, cands):
    """Largest candidate tile that divides n; falls back to the full dim."""
    for c in cands:
        if c <= n and n % c == 0:
            return c
    return n


_VMEM_LIMIT = [None]


def _vmem_limit():
    if _VMEM_LIMIT[0] is None:
        try:
            cap = int(pltpu.get_tpu_info().vmem_capacity_bytes)
        except Exception:
            cap = 128 * 1024 * 1024
        # half of physical VMEM, capped at 48 MiB (v7x: 32 MiB, v5e/v6e: 48).
        _VMEM_LIMIT[0] = min(cap // 2, 48 * 1024 * 1024)
    return _VMEM_LIMIT[0]


def _cparams(semantics):
    return pltpu.CompilerParams(dimension_semantics=semantics,
                                vmem_limit_bytes=_vmem_limit())


# --------------------------------------------------------------------------
# Tiled matmul (1x1 convs, im2col convs, fc): bf16 operands, f32 accumulate,
# K-tiled grid, output block resident across K.
# --------------------------------------------------------------------------
def _mm_kernel(x_ref, w_ref, o_ref, acc_ref):
    @pl.when(pl.program_id(2) == 0)
    def _():
        acc_ref[...] = jnp.zeros_like(acc_ref)
    acc_ref[...] += jnp.dot(x_ref[...], w_ref[...],
                            preferred_element_type=jnp.float32)

    @pl.when(pl.program_id(2) == pl.num_programs(2) - 1)
    def _():
        o_ref[...] = acc_ref[...].astype(o_ref.dtype)


def _mm_bias_kernel(x_ref, w_ref, b_ref, o_ref, acc_ref):
    @pl.when(pl.program_id(2) == 0)
    def _():
        acc_ref[...] = jnp.zeros_like(acc_ref)
    acc_ref[...] += jnp.dot(x_ref[...], w_ref[...],
                            preferred_element_type=jnp.float32)

    @pl.when(pl.program_id(2) == pl.num_programs(2) - 1)
    def _():
        o_ref[...] = (acc_ref[...] + b_ref[...]).astype(o_ref.dtype)


def pallas_matmul(x, w, bias=None, out_dtype=jnp.bfloat16):
    """[M,K] @ [K,N] (+ [N]) -> [M,N]."""
    M, K = x.shape
    _, N = w.shape
    x = x.astype(jnp.bfloat16)
    w = w.astype(jnp.bfloat16)
    tm = _pick_tile(M, _ROW_TILES)
    tn = _pick_tile(N, _N_TILES)
    tk = _pick_tile(K, _K_TILES)
    grid = (M // tm, N // tn, K // tk)
    x_spec = pl.BlockSpec((tm, tk), lambda i, j, k: (i, k))
    w_spec = pl.BlockSpec((tk, tn), lambda i, j, k: (k, j))
    o_spec = pl.BlockSpec((tm, tn), lambda i, j, k: (i, j))
    scratch = [pltpu.VMEM((tm, tn), jnp.float32)]
    cp = _cparams(("parallel", "parallel", "arbitrary"))
    if bias is None:
        return pl.pallas_call(
            _mm_kernel,
            out_shape=jax.ShapeDtypeStruct((M, N), out_dtype),
            grid_spec=pltpu.PrefetchScalarGridSpec(
                num_scalar_prefetch=0, grid=grid,
                in_specs=[x_spec, w_spec], out_specs=o_spec,
                scratch_shapes=scratch),
            compiler_params=cp,
        )(x, w)
    b2 = bias.reshape(1, N).astype(jnp.float32)
    b_spec = pl.BlockSpec((1, tn), lambda i, j, k: (0, j))
    return pl.pallas_call(
        _mm_bias_kernel,
        out_shape=jax.ShapeDtypeStruct((M, N), out_dtype),
        grid_spec=pltpu.PrefetchScalarGridSpec(
            num_scalar_prefetch=0, grid=grid,
            in_specs=[x_spec, w_spec, b_spec], out_specs=o_spec,
            scratch_shapes=scratch),
        compiler_params=cp,
    )(x, w, b2)


# --------------------------------------------------------------------------
# Direct stride-1 3x3 conv (pad=1): no im2col materialization in HBM.
# --------------------------------------------------------------------------
def _conv3x3_s1_kernel(x_ref, w_ref, o_ref, *, H, W):
    # x_ref: (1, H+2, W+2, C) bf16, w_ref: (9, C, tn) bf16, o_ref: (1, H, W, tn)
    C = x_ref.shape[-1]
    tn = o_ref.shape[-1]
    xv = x_ref[0]                                      # (H+2, W+2, C)
    acc = jnp.zeros((H * W, tn), jnp.float32)
    for ki in range(3):
        for kj in range(3):
            xt = xv[ki:ki + H, kj:kj + W, :].reshape(H * W, C)
            acc = acc + jnp.dot(xt, w_ref[ki * 3 + kj],
                                preferred_element_type=jnp.float32)
    o_ref[...] = acc.reshape(1, H, W, tn).astype(o_ref.dtype)


def conv3x3_s1(x, w9):
    """x: [N,H,W,C] bf16, w9: (9, C, Cout) -> [N,H,W,Cout] bf16."""
    N, H, W, C = x.shape
    Cout = w9.shape[-1]
    xp = jnp.pad(x.astype(jnp.bfloat16), ((0, 0), (1, 1), (1, 1), (0, 0)))
    tn = 256 if (Cout % 256 == 0 and Cout > 256) else Cout
    grid = (N, Cout // tn)
    # TODO(synk): band-tile the H axis for very large spatial sizes (whole
    # padded image per grid step is fine for standard ResNet resolutions).
    return pl.pallas_call(
        functools.partial(_conv3x3_s1_kernel, H=H, W=W),
        out_shape=jax.ShapeDtypeStruct((N, H, W, Cout), jnp.bfloat16),
        grid_spec=pltpu.PrefetchScalarGridSpec(
            num_scalar_prefetch=0, grid=grid,
            in_specs=[pl.BlockSpec((1, H + 2, W + 2, C),
                                   lambda n, j: (n, 0, 0, 0)),
                      pl.BlockSpec((9, C, tn), lambda n, j: (0, 0, j))],
            out_specs=pl.BlockSpec((1, H, W, tn), lambda n, j: (n, 0, 0, j))),
        compiler_params=_cparams(("parallel", "parallel")),
    )(xp, w9.astype(jnp.bfloat16))


# --------------------------------------------------------------------------
# BatchNorm (training-mode batch statistics) - tiled two-pass.
# --------------------------------------------------------------------------
def _colstats_kernel(x_ref, s_ref, q_ref):
    @pl.when(pl.program_id(1) == 0)
    def _():
        s_ref[...] = jnp.zeros_like(s_ref)
        q_ref[...] = jnp.zeros_like(q_ref)
    x = x_ref[...].astype(jnp.float32)
    s_ref[...] += jnp.sum(x, axis=0, keepdims=True)
    q_ref[...] += jnp.sum(x * x, axis=0, keepdims=True)


def _bn_apply_kernel(x_ref, a_ref, b_ref, o_ref, *, relu):
    y = x_ref[...].astype(jnp.float32) * a_ref[...] + b_ref[...]
    if relu:
        y = jnp.maximum(y, 0.0)
    o_ref[...] = y.astype(o_ref.dtype)


def _bn_apply_res_kernel(x_ref, a_ref, b_ref, r_ref, o_ref):
    y = x_ref[...].astype(jnp.float32) * a_ref[...] + b_ref[...]
    y = jnp.maximum(y + r_ref[...].astype(jnp.float32), 0.0)
    o_ref[...] = y.astype(o_ref.dtype)


def bn_act(x2d, gamma, beta, relu, residual=None):
    """BatchNorm over rows of [M, C] with exact full-M per-channel stats.
    Pass 1: tiled sum / sum-of-squares reduction (M axis "arbitrary").
    Pass 2: tiled normalize + optional fused residual add + ReLU, bf16 out.
    C < 128 is lane-folded ([M,C] viewed as [M/f, C*f]) for lane-dense stores;
    the fold is undone exactly when forming the statistics."""
    M, C = x2d.shape
    fold = 1
    if C < 128 and 128 % C == 0 and M % (128 // C) == 0:
        fold = 128 // C
    Mf, Cf = M // fold, C * fold
    xv = x2d.reshape(Mf, Cf)

    tc = _pick_tile(Cf, _C_TILES)
    tm = _pick_tile(Mf, _ROW_TILES)

    s, q = pl.pallas_call(
        _colstats_kernel,
        out_shape=(jax.ShapeDtypeStruct((1, Cf), jnp.float32),
                   jax.ShapeDtypeStruct((1, Cf), jnp.float32)),
        grid_spec=pltpu.PrefetchScalarGridSpec(
            num_scalar_prefetch=0, grid=(Cf // tc, Mf // tm),
            in_specs=[pl.BlockSpec((tm, tc), lambda c, m: (m, c))],
            out_specs=(pl.BlockSpec((1, tc), lambda c, m: (0, c)),
                       pl.BlockSpec((1, tc), lambda c, m: (0, c)))),
        compiler_params=_cparams(("parallel", "arbitrary")),
    )(xv)

    # Tiny O(C) per-channel scale/shift math (plain JAX glue).
    if fold > 1:
        s = s.reshape(fold, C).sum(axis=0)
        q = q.reshape(fold, C).sum(axis=0)
    else:
        s, q = s[0], q[0]
    mean = s / M
    var = jnp.maximum(q / M - mean * mean, 0.0)        # biased (training mode)
    scale = gamma.astype(jnp.float32) * lax.rsqrt(var + EPS)
    shift = beta.astype(jnp.float32) - mean * scale
    if fold > 1:
        scale = jnp.tile(scale, fold)
        shift = jnp.tile(shift, fold)
    scale = scale.reshape(1, Cf)
    shift = shift.reshape(1, Cf)

    in_specs = [pl.BlockSpec((tm, tc), lambda i, c: (i, c)),
                pl.BlockSpec((1, tc), lambda i, c: (0, c)),
                pl.BlockSpec((1, tc), lambda i, c: (0, c))]
    args = [xv, scale, shift]
    if residual is None:
        kern = functools.partial(_bn_apply_kernel, relu=relu)
    else:
        kern = _bn_apply_res_kernel
        in_specs.append(pl.BlockSpec((tm, tc), lambda i, c: (i, c)))
        args.append(residual.reshape(Mf, Cf))

    out = pl.pallas_call(
        kern,
        out_shape=jax.ShapeDtypeStruct((Mf, Cf), jnp.bfloat16),
        grid_spec=pltpu.PrefetchScalarGridSpec(
            num_scalar_prefetch=0, grid=(Mf // tm, Cf // tc),
            in_specs=in_specs,
            out_specs=pl.BlockSpec((tm, tc), lambda i, c: (i, c))),
        compiler_params=_cparams(("parallel", "parallel")),
    )(*args)
    return out.reshape(M, C)


# --------------------------------------------------------------------------
# Max-pool 3x3/2 pad 1 and global avg-pool.
# --------------------------------------------------------------------------
def _max9_kernel(t0, t1, t2, t3, t4, t5, t6, t7, t8, o_ref):
    m = t0[...]
    for t in (t1, t2, t3, t4, t5, t6, t7, t8):
        m = jnp.maximum(m, t[...])
    o_ref[...] = m


def maxpool3x3_s2p1(x):
    """x: [N,H,W,C] bf16 -> [N,Ho,Wo,C] bf16.
    # TODO(synk): form the 9 taps in-kernel from a single HBM read of the
    # padded tensor (stride-2 window reads) instead of XLA tap staging."""
    N, H, W, C = x.shape
    k, s, pad = 3, 2, 1
    Ho = (H + 2 * pad - k) // s + 1
    Wo = (W + 2 * pad - k) // s + 1
    xp = jnp.pad(x.astype(jnp.bfloat16),
                 ((0, 0), (pad, pad), (pad, pad), (0, 0)),
                 constant_values=-jnp.inf)
    M = N * Ho * Wo
    fold = 1
    if C < 128 and 128 % C == 0 and M % (128 // C) == 0:
        fold = 128 // C
    Mf, Cf = M // fold, C * fold
    taps = []
    for i in range(k):
        for j in range(k):
            t = xp[:, i:i + s * Ho:s, j:j + s * Wo:s, :]
            taps.append(t.reshape(Mf, Cf))
    tm = _pick_tile(Mf, _ROW_TILES)
    spec = pl.BlockSpec((tm, Cf), lambda i: (i, 0))
    out = pl.pallas_call(
        _max9_kernel,
        out_shape=jax.ShapeDtypeStruct((Mf, Cf), jnp.bfloat16),
        grid_spec=pltpu.PrefetchScalarGridSpec(
            num_scalar_prefetch=0, grid=(Mf // tm,),
            in_specs=[spec] * 9, out_specs=spec),
        compiler_params=_cparams(("parallel",)),
    )(*taps)
    return out.reshape(N, Ho, Wo, C)


def _avgpool_kernel(x_ref, o_ref):
    o_ref[...] = jnp.mean(x_ref[...].astype(jnp.float32),
                          axis=1).astype(o_ref.dtype)


def avgpool(x):
    """[N, H, W, C] -> [N, C]  (AdaptiveAvgPool2d((1,1))), tiled over C."""
    N, H, W, C = x.shape
    x3 = x.reshape(N, H * W, C)
    tc = _pick_tile(C, _C_TILES)
    return pl.pallas_call(
        _avgpool_kernel,
        out_shape=jax.ShapeDtypeStruct((N, C), jnp.bfloat16),
        grid_spec=pltpu.PrefetchScalarGridSpec(
            num_scalar_prefetch=0, grid=(C // tc,),
            in_specs=[pl.BlockSpec((N, H * W, tc), lambda c: (0, 0, c))],
            out_specs=pl.BlockSpec((N, tc), lambda c: (0, c))),
        compiler_params=_cparams(("parallel",)),
    )(x3)


# --------------------------------------------------------------------------
# Plain-JAX glue: im2col fallback, conv wrappers, block / network forward.
# --------------------------------------------------------------------------
def im2col(x, kh, kw, stride, pad):
    """[N,H,W,C] bf16 -> ([N*Ho*Wo, kh*kw*C], Ho, Wo); feature order (ki,kj,c).
    # TODO(synk): stride-2 3x3 convs and the 7x7 stem still materialize
    # im2col patches in HBM; stride-1 3x3 convs use the direct kernel."""
    N, H, W, C = x.shape
    Ho = (H + 2 * pad - kh) // stride + 1
    Wo = (W + 2 * pad - kw) // stride + 1
    xp = jnp.pad(x, ((0, 0), (pad, pad), (pad, pad), (0, 0)))
    cols = []
    for i in range(kh):
        for j in range(kw):
            cols.append(xp[:, i:i + stride * Ho:stride,
                           j:j + stride * Wo:stride, :])
    patches = jnp.concatenate(cols, axis=-1)
    return patches.reshape(N * Ho * Wo, kh * kw * C), Ho, Wo


def conv1x1(x, w2d, stride=1):
    N, H, W, C = x.shape
    xs = x[:, ::stride, ::stride, :] if stride > 1 else x
    Ho, Wo = xs.shape[1], xs.shape[2]
    y = pallas_matmul(xs.reshape(N * Ho * Wo, C), w2d)
    return y.reshape(N, Ho, Wo, w2d.shape[1])


def conv3x3(x, w9, stride):
    N, H, W, C = x.shape
    Cout = w9.shape[-1]
    if stride == 1:
        return conv3x3_s1(x, w9)
    cols, Ho, Wo = im2col(x, 3, 3, stride, 1)
    y = pallas_matmul(cols, w9.reshape(9 * C, Cout))
    return y.reshape(N, Ho, Wo, Cout)


def block_forward(x, p):
    # Conv biases are dropped throughout: a per-channel constant added before
    # batch-stat BatchNorm cancels exactly in (x - mean) -> identical output.
    identity = x
    s = p["stride"]
    y = conv1x1(x, p["w1"])
    N, H, W, C = y.shape
    y = bn_act(y.reshape(N * H * W, C), p["g1"], p["be1"],
               relu=True).reshape(N, H, W, C)
    y = conv3x3(y, p["w2"], stride=s)
    N, Ho, Wo, C = y.shape
    y = bn_act(y.reshape(N * Ho * Wo, C), p["g2"], p["be2"], relu=True)
    # conv3 (1x1 -> 4C); its BN + residual add + ReLU are fused in one kernel.
    y3 = pallas_matmul(y, p["w3"])
    if p["has_ds"]:
        idn = identity[:, ::s, ::s, :] if s > 1 else identity
        idm = pallas_matmul(idn.reshape(N * Ho * Wo, -1), p["wd"])
        idm = bn_act(idm, p["gd"], p["bed"], relu=False)
    else:
        idm = identity.reshape(N * Ho * Wo, -1)
    out = bn_act(y3, p["g3"], p["be3"], relu=True, residual=idm)
    return out.reshape(N, Ho, Wo, -1)


def resnet_forward(params, x_nchw):
    # NCHW (PyTorch) -> NHWC, bf16 activations end to end.
    x = jnp.transpose(x_nchw, (0, 2, 3, 1)).astype(jnp.bfloat16)
    N = x.shape[0]
    cols, Ho, Wo = im2col(x, 7, 7, 2, 3)
    y = pallas_matmul(cols, params["conv1_w"])
    y = bn_act(y, params["bn1_g"], params["bn1_b"], relu=True)
    x = y.reshape(N, Ho, Wo, 64)
    x = maxpool3x3_s2p1(x)
    for layer in params["blocks"]:
        for blk in layer:
            x = block_forward(x, blk)
    feat = avgpool(x)                                   # [N, C] bf16
    logits = pallas_matmul(feat, params["fc_w"], bias=params["fc_b"],
                           out_dtype=jnp.float32)
    return logits


# --------------------------------------------------------------------------
# Deterministic parameter init (shapes follow ResNet(layers, 3, num_classes));
# weights are pre-cast to bf16 once here (review: no per-forward cast copies).
# --------------------------------------------------------------------------
def init_params(key, layers=(1, 1, 1, 1), image_channels=3, num_classes=10):
    def conv_w(k, kh, kw, cin, cout):
        w = jax.random.normal(k, (kh, kw, cin, cout), jnp.float32)
        w = w / jnp.sqrt(float(kh * kw * cin))
        # (kh*kw, cin, cout): matches the im2col / tap feature order (ki,kj,c)
        return w.reshape(kh * kw, cin, cout).astype(jnp.bfloat16)

    keys = iter(jax.random.split(key, 256))
    params = {}
    params["conv1_w"] = conv_w(next(keys), 7, 7, image_channels,
                               64).reshape(49 * image_channels, 64)
    params["bn1_g"] = jnp.ones((64,), jnp.float32)
    params["bn1_b"] = jnp.zeros((64,), jnp.float32)

    prev = 64
    blocks = []
    for nblocks, ch, stride0 in zip(layers, (64, 128, 256, 512), (1, 2, 2, 2)):
        layer = []
        for bi in range(nblocks):
            s = stride0 if bi == 0 else 1
            p = {"stride": s}
            p["w1"] = conv_w(next(keys), 1, 1, prev, ch).reshape(prev, ch)
            p["g1"] = jnp.ones((ch,), jnp.float32)
            p["be1"] = jnp.zeros((ch,), jnp.float32)
            p["w2"] = conv_w(next(keys), 3, 3, ch, ch)          # (9, ch, ch)
            p["g2"] = jnp.ones((ch,), jnp.float32)
            p["be2"] = jnp.zeros((ch,), jnp.float32)
            p["w3"] = conv_w(next(keys), 1, 1, ch, ch * 4).reshape(ch, ch * 4)
            p["g3"] = jnp.ones((ch * 4,), jnp.float32)
            p["be3"] = jnp.zeros((ch * 4,), jnp.float32)
            has_ds = (bi == 0) and (s != 1 or prev != ch * 4)
            if has_ds:
                p["wd"] = conv_w(next(keys), 1, 1, prev,
                                 ch * 4).reshape(prev, ch * 4)
                p["gd"] = jnp.ones((ch * 4,), jnp.float32)
                p["bed"] = jnp.zeros((ch * 4,), jnp.float32)
            p["has_ds"] = has_ds
            layer.append(p)
            prev = ch * 4
        blocks.append(layer)
    params["blocks"] = blocks

    params["fc_w"] = (jax.random.normal(next(keys), (prev, num_classes),
                                        jnp.float32)
                      / jnp.sqrt(float(prev))).astype(jnp.bfloat16)
    params["fc_b"] = jnp.zeros((num_classes,), jnp.float32)
    return params


# --------------------------------------------------------------------------
if __name__ == "__main__":
    key = jax.random.PRNGKey(0)
    pkey, xkey = jax.random.split(key)
    # Small ResNet: layers=[1,1,1,1], 3 input channels, 10 classes, 32x32 imgs
    params = init_params(pkey, layers=(1, 1, 1, 1), image_channels=3,
                         num_classes=10)
    x = jax.random.normal(xkey, (2, 3, 32, 32), jnp.float32)  # NCHW, PyTorch-like

    logits = resnet_forward(params, x)
    logits = jax.block_until_ready(logits)

    assert logits.shape == (2, 10), logits.shape
    assert bool(jnp.all(jnp.isfinite(logits)))
    print("KERNEL_OK")
</pallas_src>

<mosaic_0001>
module attributes {stable_mosaic.version = 11 : i64} {
  func.func @_mm_kernel(%arg0: i32, %arg1: i32, %arg2: i32, %arg3: memref<512x147xbf16, #tpu.memory_space<vmem>>, %arg4: memref<147x64xbf16, #tpu.memory_space<vmem>>, %arg5: memref<512x64xbf16, #tpu.memory_space<vmem>>, %arg6: memref<512x64xf32, #tpu.memory_space<vmem>>) attributes {dimension_semantics = [#tpu.dimension_semantics<parallel>, #tpu.dimension_semantics<parallel>, #tpu.dimension_semantics<arbitrary>], iteration_bounds = array<i64: 1, 1, 1>, scalar_prefetch = 0 : i64, scratch_operands = 1 : i64, tpu.core_type = #tpu.core_type<tc>, window_params = [{transform_indices = @transform_0, window_bounds = array<i64: 512, 147>}, {transform_indices = @transform_1, window_bounds = array<i64: 147, 64>}, {transform_indices = @transform_2, window_bounds = array<i64: 512, 64>}]} {
    %c0_i32 = arith.constant 0 : i32
    %0 = arith.cmpi eq, %arg2, %c0_i32 : i32
    %1 = arith.extui %0 : i1 to i32
    %c0_i32_0 = arith.constant 0 : i32
    %2 = arith.cmpi ne, %1, %c0_i32_0 : i32
    scf.if %2 {
      %cst_10 = arith.constant 0.000000e+00 : f32
      %12 = vector.broadcast %cst_10 : f32 to vector<512x64xf32>
      %c0_11 = arith.constant 0 : index
      %c0_12 = arith.constant 0 : index
      %13 = vector.load %arg6[%c0_11, %c0_12] : memref<512x64xf32, #tpu.memory_space<vmem>>, vector<512x64xf32>
      tpu.vector_store %arg6[%c0_11, %c0_12], %12 {strides = array<i32>} : memref<512x64xf32, #tpu.memory_space<vmem>>, vector<512x64xf32>,
    } else {
    }
    %c0 = arith.constant 0 : index
    %c0_1 = arith.constant 0 : index
    %3 = vector.load %arg6[%c0, %c0_1] : memref<512x64xf32, #tpu.memory_space<vmem>>, vector<512x64xf32>
    %c0_2 = arith.constant 0 : index
    %c0_3 = arith.constant 0 : index
    %4 = vector.load %arg3[%c0_2, %c0_3] : memref<512x147xbf16, #tpu.memory_space<vmem>>, vector<512x147xbf16>
    %c0_4 = arith.constant 0 : index
    %c0_5 = arith.constant 0 : index
    %5 = vector.load %arg4[%c0_4, %c0_5] : memref<147x64xbf16, #tpu.memory_space<vmem>>, vector<147x64xbf16>
    %cst = arith.constant dense<0.000000e+00> : vector<512x64xf32>
    %6 = tpu.matmul %4, %5, %cst {dimension_numbers = #tpu.dot_dimension_numbers<[1], [0], [0], [1], [0, 0, 1, 1], [], []>} : vector<512x147xbf16>, vector<147x64xbf16>, vector<512x64xf32> -> vector<512x64xf32>
    %7 = arith.addf %3, %6 : vector<512x64xf32>
    %c0_6 = arith.constant 0 : index
    %c0_7 = arith.constant 0 : index
    %8 = vector.load %arg6[%c0_6, %c0_7] : memref<512x64xf32, #tpu.memory_space<vmem>>, vector<512x64xf32>
    tpu.vector_store %arg6[%c0_6, %c0_7], %7 {strides = array<i32>} : memref<512x64xf32, #tpu.memory_space<vmem>>, vector<512x64xf32>,
    %c0_i32_8 = arith.constant 0 : i32
    %9 = arith.cmpi eq, %arg2, %c0_i32_8 : i32
    %10 = arith.extui %9 : i1 to i32
    %c0_i32_9 = arith.constant 0 : i32
    %11 = arith.cmpi ne, %10, %c0_i32_9 : i32
    scf.if %11 {
      %c0_10 = arith.constant 0 : index
      %c0_11 = arith.constant 0 : index
      %12 = vector.load %arg6[%c0_10, %c0_11] : memref<512x64xf32, #tpu.memory_space<vmem>>, vector<512x64xf32>
      %13 = arith.truncf %12 : vector<512x64xf32> to vector<512x64xbf16>
      %c0_12 = arith.constant 0 : index
      %c0_13 = arith.constant 0 : index
      %14 = vector.load %arg5[%c0_12, %c0_13] : memref<512x64xbf16, #tpu.memory_space<vmem>>, vector<512x64xbf16>
      tpu.vector_store %arg5[%c0_12, %c0_13], %13 {strides = array<i32>} : memref<512x64xbf16, #tpu.memory_space<vmem>>, vector<512x64xbf16>,
    } else {
    }
    return
  }
  func.func @transform_0(%arg0: i32, %arg1: i32, %arg2: i32) -> (i32, i32) {
    %c0_i32 = arith.constant 0 : i32
    return %arg0, %arg2 : i32, i32
  }
  func.func @transform_1(%arg0: i32, %arg1: i32, %arg2: i32) -> (i32, i32) {
    %c0_i32 = arith.constant 0 : i32
    return %arg2, %arg1 : i32, i32
  }
  func.func @transform_2(%arg0: i32, %arg1: i32, %arg2: i32) -> (i32, i32) {
    %c0_i32 = arith.constant 0 : i32
    return %arg0, %arg1 : i32, i32
  }
}

</mosaic_0001>

<llo_original>
// kernel: tpu_custom_call.1
$region0: #{tpu_custom_call.1}
  #allocation0 [shape = 'u32[]', space=smem, size = 0x4, offset = 0x4, fixed_abs, tag = 'smem constant byte address 0x4 - core index']
  #allocation1 [shape = 'u32[144,128]{1,0:T(1,128)}', space=vmem, size = 0x12000, scoped, tag = 'internal scratch']
  #allocation2 [shape = 'f32[512,64]{1,0:T(8,128)}', space=vmem, size = 0x40000, scoped, tag = 'scratch operand']
  %s0 = inlined_call_operand.vmem [shape: bf16[512,147], index: 0, kind: input, shape index: {}]
  %s1 = inlined_call_operand.vmem [shape: bf16[147,64], index: 1, kind: input, shape index: {}]
  %s2 = inlined_call_operand.vmem [shape: bf16[512,64], index: 2, kind: output, shape index: {}]
  %s3 = sld [smem:[#allocation0]]
  $region26: #{tpu_custom_call.1} parent=0
    _
  %s5 = ssub.s32 1, %s3
  %s6 = scalar_select 0, %s5, %s3
  // Predicated region
  $region2: #{tpu_custom_call.1} parent=0 // pred_check
    _
  $region3: #{tpu_custom_call.1} parent=0 // pred_check_branch
    %8 = sbr.rel (0) target = $region5
  $region4: #{tpu_custom_call.1} parent=0 // pred_region
    _
  $region5: #{tpu_custom_call.1} parent=0 // pred_fallthru
    _
  // Predicated region
  $region6: #{tpu_custom_call.1} parent=0 // pred_check
    _
  $region7: #{tpu_custom_call.1} parent=0 // pred_check_branch
    %10 = sbr.rel (0) target = $region9
  $region8: #{tpu_custom_call.1} parent=0 // pred_region
    _
  $region9: #{tpu_custom_call.1} parent=0 // pred_fallthru
    _
  %p12 = scmp.eq.s32.totalorder 0, 0
  // Predicated region
  $region10: #{tpu_custom_call.1} parent=0 // pred_check
    %p13 = pneg %p12
  $region11: #{tpu_custom_call.1} parent=0 // pred_check_branch
    %15 = sbr.rel (%p13) target = $region13
  $region12: #{tpu_custom_call.1} parent=0 // pred_region
    %vm16 = vcmask 523264
    %17 = vst.msk [vmem:[#allocation2] sm:$0xff] %vm16, 0.0
    %18 = vst.msk [vmem:[#allocation2 + $0x8] sm:$0xff] %vm16, 0.0
    %19 = vst.msk [vmem:[#allocation2 + $0x10] sm:$0xff] %vm16, 0.0
    %20 = vst.msk [vmem:[#allocation2 + $0x18] sm:$0xff] %vm16, 0.0
    %21 = vst.msk [vmem:[#allocation2 + $0x20] sm:$0xff] %vm16, 0.0
    %22 = vst.msk [vmem:[#allocation2 + $0x28] sm:$0xff] %vm16, 0.0
    %23 = vst.msk [vmem:[#allocation2 + $0x30] sm:$0xff] %vm16, 0.0
    %24 = vst.msk [vmem:[#allocation2 + $0x38] sm:$0xff] %vm16, 0.0
    %25 = vst.msk [vmem:[#allocation2 + $0x40] sm:$0xff] %vm16, 0.0
    %26 = vst.msk [vmem:[#allocation2 + $0x48] sm:$0xff] %vm16, 0.0
    %27 = vst.msk [vmem:[#allocation2 + $0x50] sm:$0xff] %vm16, 0.0
    %28 = vst.msk [vmem:[#allocation2 + $0x58] sm:$0xff] %vm16, 0.0
    %29 = vst.msk [vmem:[#allocation2 + $0x60] sm:$0xff] %vm16, 0.0
    %30 = vst.msk [vmem:[#allocation2 + $0x68] sm:$0xff] %vm16, 0.0
    %31 = vst.msk [vmem:[#allocation2 + $0x70] sm:$0xff] %vm16, 0.0
    %32 = vst.msk [vmem:[#allocation2 + $0x78] sm:$0xff] %vm16, 0.0
    %33 = vst.msk [vmem:[#allocation2 + $0x80] sm:$0xff] %vm16, 0.0
    %34 = vst.msk [vmem:[#allocation2 + $0x88] sm:$0xff] %vm16, 0.0
    %35 = vst.msk [vmem:[#allocation2 + $0x90] sm:$0xff] %vm16, 0.0
    %36 = vst.msk [vmem:[#allocation2 + $0x98] sm:$0xff] %vm16, 0.0
    %37 = vst.msk [vmem:[#allocation2 + $0xa0] sm:$0xff] %vm16, 0.0
    %38 = vst.msk [vmem:[#allocation2 + $0xa8] sm:$0xff] %vm16, 0.0
    %39 = vst.msk [vmem:[#allocation2 + $0xb0] sm:$0xff] %vm16, 0.0
    %40 = vst.msk [vmem:[#allocation2 + $0xb8] sm:$0xff] %vm16, 0.0
    %41 = vst.msk [vmem:[#allocation2 + $0xc0] sm:$0xff] %vm16, 0.0
    %42 = vst.msk [vmem:[#allocation2 + $0xc8] sm:$0xff] %vm16, 0.0
    %43 = vst.msk [vmem:[#allocation2 + $0xd0] sm:$0xff] %vm16, 0.0
    %44 = vst.msk [vmem:[#allocation2 + $0xd8] sm:$0xff] %vm16, 0.0
    %45 = vst.msk [vmem:[#allocation2 + $0xe0] sm:$0xff] %vm16, 0.0
    %46 = vst.msk [vmem:[#allocation2 + $0xe8] sm:$0xff] %vm16, 0.0
    %47 = vst.msk [vmem:[#allocation2 + $0xf0] sm:$0xff] %vm16, 0.0
    %48 = vst.msk [vmem:[#allocation2 + $0xf8] sm:$0xff] %vm16, 0.0
    %49 = vst.msk [vmem:[#allocation2 + $0x100] sm:$0xff] %vm16, 0.0
    %50 = vst.msk [vmem:[#allocation2 + $0x108] sm:$0xff] %vm16, 0.0
    %51 = vst.msk [vmem:[#allocation2 + $0x110] sm:$0xff] %vm16, 0.0
    %52 = vst.msk [vmem:[#allocation2 + $0x118] sm:$0xff] %vm16, 0.0
    %53 = vst.msk [vmem:[#allocation2 + $0x120] sm:$0xff] %vm16, 0.0
    %54 = vst.msk [vmem:[#allocation2 + $0x128] sm:$0xff] %vm16, 0.0
    %55 = vst.msk [vmem:[#allocation2 + $0x130] sm:$0xff] %vm16, 0.0
    %56 = vst.msk [vmem:[#allocation2 + $0x138] sm:$0xff] %vm16, 0.0
    %57 = vst.msk [vmem:[#allocation2 + $0x140] sm:$0xff] %vm16, 0.0
    %58 = vst.msk [vmem:[#allocation2 + $0x148] sm:$0xff] %vm16, 0.0
    %59 = vst.msk [vmem:[#allocation2 + $0x150] sm:$0xff] %vm16, 0.0
    %60 = vst.msk [vmem:[#allocation2 + $0x158] sm:$0xff] %vm16, 0.0
    %61 = vst.msk [vmem:[#allocation2 + $0x160] sm:$0xff] %vm16, 0.0
    %62 = vst.msk [vmem:[#allocation2 + $0x168] sm:$0xff] %vm16, 0.0
    %63 = vst.msk [vmem:[#allocation2 + $0x170] sm:$0xff] %vm16, 0.0
    %64 = vst.msk [vmem:[#allocation2 + $0x178] sm:$0xff] %vm16, 0.0
    %65 = vst.msk [vmem:[#allocation2 + $0x180] sm:$0xff] %vm16, 0.0
    %66 = vst.msk [vmem:[#allocation2 + $0x188] sm:$0xff] %vm16, 0.0
    %67 = vst.msk [vmem:[#allocation2 + $0x190] sm:$0xff] %vm16, 0.0
    %68 = vst.msk [vmem:[#allocation2 + $0x198] sm:$0xff] %vm16, 0.0
    %69 = vst.msk [vmem:[#allocation2 + $0x1a0] sm:$0xff] %vm16, 0.0
    %70 = vst.msk [vmem:[#allocation2 + $0x1a8] sm:$0xff] %vm16, 0.0
    %71 = vst.msk [vmem:[#allocation2 + $0x1b0] sm:$0xff] %vm16, 0.0
    %72 = vst.msk [vmem:[#allocation2 + $0x1b8] sm:$0xff] %vm16, 0.0
    %73 = vst.msk [vmem:[#allocation2 + $0x1c0] sm:$0xff] %vm16, 0.0
    %74 = vst.msk [vmem:[#allocation2 + $0x1c8] sm:$0xff] %vm16, 0.0
    %75 = vst.msk [vmem:[#allocation2 + $0x1d0] sm:$0xff] %vm16, 0.0
    %76 = vst.msk [vmem:[#allocation2 + $0x1d8] sm:$0xff] %vm16, 0.0
    %77 = vst.msk [vmem:[#allocation2 + $0x1e0] sm:$0xff] %vm16, 0.0
    %78 = vst.msk [vmem:[#allocation2 + $0x1e8] sm:$0xff] %vm16, 0.0
    %79 = vst.msk [vmem:[#allocation2 + $0x1f0] sm:$0xff] %vm16, 0.0
    %80 = vst.msk [vmem:[#allocation2 + $0x1f8] sm:$0xff] %vm16, 0.0
  $region13: #{tpu_custom_call.1} parent=0 // pred_fallthru
    _
  %v81 = vld [vmem:[#allocation2] sm:$0xff]
  %v82 = vld [vmem:[#allocation2 + $0x8] sm:$0xff]
  %v83 = vld [vmem:[#allocation2 + $0x10] sm:$0xff]
  %v84 = vld [vmem:[#allocation2 + $0x18] sm:$0xff]
  %v85 = vld [vmem:[#allocation2 + $0x20] sm:$0xff]
  %v86 = vld [vmem:[#allocation2 + $0x28] sm:$0xff]
  %v87 = vld [vmem:[#allocation2 + $0x30] sm:$0xff]
  %v88 = vld [vmem:[#allocation2 + $0x38] sm:$0xff]
  %v89 = vld [vmem:[#allocation2 + $0x40] sm:$0xff]
  %v90 = vld [vmem:[#allocation2 + $0x48] sm:$0xff]
  %v91 = vld [vmem:[#allocation2 + $0x50] sm:$0xff]
  %v92 = vld [vmem:[#allocation2 + $0x58] sm:$0xff]
  %v93 = vld [vmem:[#allocation2 + $0x60] sm:$0xff]
  %v94 = vld [vmem:[#allocation2 + $0x68] sm:$0xff]
  %v95 = vld [vmem:[#allocation2 + $0x70] sm:$0xff]
  %v96 = vld [vmem:[#allocation2 + $0x78] sm:$0xff]
  %v97 = vld [vmem:[#allocation2 + $0x80] sm:$0xff]
  %v98 = vld [vmem:[#allocation2 + $0x88] sm:$0xff]
  %v99 = vld [vmem:[#allocation2 + $0x90] sm:$0xff]
  %v100 = vld [vmem:[#allocation2 + $0x98] sm:$0xff]
  %v101 = vld [vmem:[#allocation2 + $0xa0] sm:$0xff]
  %v102 = vld [vmem:[#allocation2 + $0xa8] sm:$0xff]
  %v103 = vld [vmem:[#allocation2 + $0xb0] sm:$0xff]
  %v104 = vld [vmem:[#allocation2 + $0xb8] sm:$0xff]
  %v105 = vld [vmem:[#allocation2 + $0xc0] sm:$0xff]
  %v106 = vld [vmem:[#allocation2 + $0xc8] sm:$0xff]
  %v107 = vld [vmem:[#allocation2 + $0xd0] sm:$0xff]
  %v108 = vld [vmem:[#allocation2 + $0xd8] sm:$0xff]
  %v109 = vld [vmem:[#allocation2 + $0xe0] sm:$0xff]
  %v110 = vld [vmem:[#allocation2 + $0xe8] sm:$0xff]
  %v111 = vld [vmem:[#allocation2 + $0xf0] sm:$0xff]
  %v112 = vld [vmem:[#allocation2 + $0xf8] sm:$0xff]
  %v113 = vld [vmem:[#allocation2 + $0x100] sm:$0xff]
  %v114 = vld [vmem:[#allocation2 + $0x108] sm:$0xff]
  %v115 = vld [vmem:[#allocation2 + $0x110] sm:$0xff]
  %v116 = vld [vmem:[#allocation2 + $0x118] sm:$0xff]
  %v117 = vld [vmem:[#allocation2 + $0x120] sm:$0xff]
  %v118 = vld [vmem:[#allocation2 + $0x128] sm:$0xff]
  %v119 = vld [vmem:[#allocation2 + $0x130] sm:$0xff]
  %v120 = vld [vmem:[#allocation2 + $0x138] sm:$0xff]
  %v121 = vld [vmem:[#allocation2 + $0x140] sm:$0xff]
  %v122 = vld [vmem:[#allocation2 + $0x148] sm:$0xff]
  %v123 = vld [vmem:[#allocation2 + $0x150] sm:$0xff]
  %v124 = vld [vmem:[#allocation2 + $0x158] sm:$0xff]
  %v125 = vld [vmem:[#allocation2 + $0x160] sm:$0xff]
  %v126 = vld [vmem:[#allocation2 + $0x168] sm:$0xff]
  %v127 = vld [vmem:[#allocation2 + $0x170] sm:$0xff]
  %v128 = vld [vmem:[#allocation2 + $0x178] sm:$0xff]
  %v129 = vld [vmem:[#allocation2 + $0x180] sm:$0xff]
  %v130 = vld [vmem:[#allocation2 + $0x188] sm:$0xff]
  %v131 = vld [vmem:[#allocation2 + $0x190] sm:$0xff]
  %v132 = vld [vmem:[#allocation2 + $0x198] sm:$0xff]
  %v133 = vld [vmem:[#allocation2 + $0x1a0] sm:$0xff]
  %v134 = vld [vmem:[#allocation2 + $0x1a8] sm:$0xff]
  %v135 = vld [vmem:[#allocation2 + $0x1b0] sm:$0xff]
  %v136 = vld [vmem:[#allocation2 + $0x1b8] sm:$0xff]
  %v137 = vld [vmem:[#allocation2 + $0x1c0] sm:$0xff]
  %v138 = vld [vmem:[#allocation2 + $0x1c8] sm:$0xff]
  %v139 = vld [vmem:[#allocation2 + $0x1d0] sm:$0xff]
  %v140 = vld [vmem:[#allocation2 + $0x1d8] sm:$0xff]
  %v141 = vld [vmem:[#allocation2 + $0x1e0] sm:$0xff]
  %v142 = vld [vmem:[#allocation2 + $0x1e8] sm:$0xff]
  %v143 = vld [vmem:[#allocation2 + $0x1f0] sm:$0xff]
  %v144 = vld [vmem:[#allocation2 + $0x1f8] sm:$0xff]
  %v145 = vld [vmem:[%s0] sm:$0xff]
  %v146 = vld [vmem:[%s0 + $0x8] sm:$0xff]
  %v147 = vld [vmem:[%s0 + $0x10] sm:$0xff]
  %v148 = vld [vmem:[%s0 + $0x18] sm:$0xff]
  %v149 = vld [vmem:[%s0 + $0x20] sm:$0xff]
  %v150 = vld [vmem:[%s0 + $0x28] sm:$0xff]
  %v151 = vld [vmem:[%s0 + $0x30] sm:$0xff]
  %v152 = vld [vmem:[%s0 + $0x38] sm:$0xff]
  %v153 = vld [vmem:[%s0 + $0x40] sm:$0xff]
  %v154 = vld [vmem:[%s0 + $0x48] sm:$0xff]
  %v155 = vld [vmem:[%s0 + $0x50] sm:$0xff]
  %v156 = vld [vmem:[%s0 + $0x58] sm:$0xff]
  %v157 = vld [vmem:[%s0 + $0x60] sm:$0xff]
  %v158 = vld [vmem:[%s0 + $0x68] sm:$0xff]
  %v159 = vld [vmem:[%s0 + $0x70] sm:$0xff]
  %v160 = vld [vmem:[%s0 + $0x78] sm:$0xff]
  %v161 = vld [vmem:[%s0 + $0x80] sm:$0xff]
  %v162 = vld [vmem:[%s0 + $0x88] sm:$0xff]
  %v163 = vld [vmem:[%s0 + $0x90] sm:$0xff]
  %v164 = vld [vmem:[%s0 + $0x98] sm:$0xff]
  %v165 = vld [vmem:[%s0 + $0xa0] sm:$0xff]
  %v166 = vld [vmem:[%s0 + $0xa8] sm:$0xff]
  %v167 = vld [vmem:[%s0 + $0xb0] sm:$0xff]
  %v168 = vld [vmem:[%s0 + $0xb8] sm:$0xff]
  %v169 = vld [vmem:[%s0 + $0xc0] sm:$0xff]
  %v170 = vld [vmem:[%s0 + $0xc8] sm:$0xff]
  %v171 = vld [vmem:[%s0 + $0xd0] sm:$0xff]
  %v172 = vld [vmem:[%s0 + $0xd8] sm:$0xff]
  %v173 = vld [vmem:[%s0 + $0xe0] sm:$0xff]
  %v174 = vld [vmem:[%s0 + $0xe8] sm:$0xff]
  %v175 = vld [vmem:[%s0 + $0xf0] sm:$0xff]
  %v176 = vld [vmem:[%s0 + $0xf8] sm:$0xff]
  %v177 = vld [vmem:[%s0 + $0x100] sm:$0xff]
  %v178 = vld [vmem:[%s0 + $0x108] sm:$0xff]
  %v179 = vld [vmem:[%s0 + $0x110] sm:$0xff]
  %v180 = vld [vmem:[%s0 + $0x118] sm:$0xff]
  %v181 = vld [vmem:[%s0 + $0x120] sm:$0xff]
  %v182 = vld [vmem:[%s0 + $0x128] sm:$0xff]
  %v183 = vld [vmem:[%s0 + $0x130] sm:$0xff]
  %v184 = vld [vmem:[%s0 + $0x138] sm:$0xff]
  %v185 = vld [vmem:[%s0 + $0x140] sm:$0xff]
  %v186 = vld [vmem:[%s0 + $0x148] sm:$0xff]
  %v187 = vld [vmem:[%s0 + $0x150] sm:$0xff]
  %v188 = vld [vmem:[%s0 + $0x158] sm:$0xff]
  %v189 = vld [vmem:[%s0 + $0x160] sm:$0xff]
  %v190 = vld [vmem:[%s0 + $0x168] sm:$0xff]
  %v191 = vld [vmem:[%s0 + $0x170] sm:$0xff]
  %v192 = vld [vmem:[%s0 + $0x178] sm:$0xff]
  %v193 = vld [vmem:[%s0 + $0x180] sm:$0xff]
  %v194 = vld [vmem:[%s0 + $0x188] sm:$0xff]
  %v195 = vld [vmem:[%s0 + $0x190] sm:$0xff]
  %v196 = vld [vmem:[%s0 + $0x198] sm:$0xff]
  %v197 = vld [vmem:[%s0 + $0x1a0] sm:$0xff]
  %v198 = vld [vmem:[%s0 + $0x1a8] sm:$0xff]
  %v199 = vld [vmem:[%s0 + $0x1b0] sm:$0xff]
  %v200 = vld [vmem:[%s0 + $0x1b8] sm:$0xff]
  %v201 = vld [vmem:[%s0 + $0x1c0] sm:$0xff]
  %v202 = vld [vmem:[%s0 + $0x1c8] sm:$0xff]
  %v203 = vld [vmem:[%s0 + $0x1d0] sm:$0xff]
  %v204 = vld [vmem:[%s0 + $0x1d8] sm:$0xff]
  %v205 = vld [vmem:[%s0 + $0x1e0] sm:$0xff]
  %v206 = vld [vmem:[%s0 + $0x1e8] sm:$0xff]
  %v207 = vld [vmem:[%s0 + $0x1f0] sm:$0xff]
  %v208 = vld [vmem:[%s0 + $0x1f8] sm:$0xff]
  %v209 = vld [vmem:[%s1] sm:$0xf]
  %v210 = vld [vmem:[%s1 + $0x4] sm:$0xf]
  %v211 = vld [vmem:[%s1 + $0x8] sm:$0xf]
  %v212 = vld [vmem:[%s1 + $0xc] sm:$0xf]
  %v213 = vld [vmem:[%s1 + $0x10] sm:$0xf]
  %v214 = vld [vmem:[%s1 + $0x14] sm:$0xf]
  %v215 = vld [vmem:[%s1 + $0x18] sm:$0xf]
  %v216 = vld [vmem:[%s1 + $0x1c] sm:$0xf]
  %v217 = vld [vmem:[%s1 + $0x20] sm:$0xf]
  %v218 = vld [vmem:[%s1 + $0x24] sm:$0xf]
  %v219 = vld [vmem:[%s1 + $0x28] sm:$0xf]
  %v220 = vld [vmem:[%s1 + $0x2c] sm:$0xf]
  %v221 = vld [vmem:[%s1 + $0x30] sm:$0xf]
  %v222 = vld [vmem:[%s1 + $0x34] sm:$0xf]
  %v223 = vld [vmem:[%s1 + $0x38] sm:$0xf]
  %v224 = vld [vmem:[%s1 + $0x3c] sm:$0xf]
  %v225 = vld [vmem:[%s1 + $0x40] sm:$0xf]
  %v226 = vld [vmem:[%s1 + $0x44] sm:$0xf]
  %v227 = vld [vmem:[%s1 + $0x48] sm:$0x3]
  %v292 = vunpack.c.l.b16 %v145
  %v293 = vunpack.c.h.b16 %v145
  %v294 = vunpack.c.l.b16 %v146
  %v295 = vunpack.c.h.b16 %v146
  %v296 = vunpack.c.l.b16 %v147
  %v297 = vunpack.c.h.b16 %v147
  %v298 = vunpack.c.l.b16 %v148
  %v299 = vunpack.c.h.b16 %v148
  %v300 = vunpack.c.l.b16 %v149
  %v301 = vunpack.c.h.b16 %v149
  %v302 = vunpack.c.l.b16 %v150
  %v303 = vunpack.c.h.b16 %v150
  %v304 = vunpack.c.l.b16 %v151
  %v305 = vunpack.c.h.b16 %v151
  %v306 = vunpack.c.l.b16 %v152
  %v307 = vunpack.c.h.b16 %v152
  %v308 = vunpack.c.l.b16 %v153
  %v309 = vunpack.c.h.b16 %v153
  %v310 = vunpack.c.l.b16 %v154
  %v311 = vunpack.c.h.b16 %v154
  %v312 = vunpack.c.l.b16 %v155
  %v313 = vunpack.c.h.b16 %v155
  %v314 = vunpack.c.l.b16 %v156
  %v315 = vunpack.c.h.b16 %v156
  %v316 = vunpack.c.l.b16 %v157
  %v317 = vunpack.c.h.b16 %v157
  %v318 = vunpack.c.l.b16 %v158
  %v319 = vunpack.c.h.b16 %v158
  %v320 = vunpack.c.l.b16 %v159
  %v321 = vunpack.c.h.b16 %v159
  %v322 = vunpack.c.l.b16 %v160
  %v323 = vunpack.c.h.b16 %v160
  %v324 = vunpack.c.l.b16 %v161
  %v325 = vunpack.c.h.b16 %v161
  %v326 = vunpack.c.l.b16 %v162
  %v327 = vunpack.c.h.b16 %v162
  %v328 = vunpack.c.l.b16 %v163
  %v329 = vunpack.c.h.b16 %v163
  %v330 = vunpack.c.l.b16 %v164
  %v331 = vunpack.c.h.b16 %v164
  %v332 = vunpack.c.l.b16 %v165
  %v333 = vunpack.c.h.b16 %v165
  %v334 = vunpack.c.l.b16 %v166
  %v335 = vunpack.c.h.b16 %v166
  %v336 = vunpack.c.l.b16 %v167
  %v337 = vunpack.c.h.b16 %v167
  %v338 = vunpack.c.l.b16 %v168
  %v339 = vunpack.c.h.b16 %v168
  %v340 = vunpack.c.l.b16 %v169
  %v341 = vunpack.c.h.b16 %v169
  %v342 = vunpack.c.l.b16 %v170
  %v343 = vunpack.c.h.b16 %v170
  %v344 = vunpack.c.l.b16 %v171
  %v345 = vunpack.c.h.b16 %v171
  %v346 = vunpack.c.l.b16 %v172
  %v347 = vunpack.c.h.b16 %v172
  %v348 = vunpack.c.l.b16 %v173
  %v349 = vunpack.c.h.b16 %v173
  %v350 = vunpack.c.l.b16 %v174
  %v351 = vunpack.c.h.b16 %v174
  %v352 = vunpack.c.l.b16 %v175
  %v353 = vunpack.c.h.b16 %v175
  %v354 = vunpack.c.l.b16 %v176
  %v355 = vunpack.c.h.b16 %v176
  %v356 = vunpack.c.l.b16 %v177
  %v357 = vunpack.c.h.b16 %v177
  %v358 = vunpack.c.l.b16 %v178
  %v359 = vunpack.c.h.b16 %v178
  %v360 = vunpack.c.l.b16 %v179
  %v361 = vunpack.c.h.b16 %v179
  %v362 = vunpack.c.l.b16 %v180
  %v363 = vunpack.c.h.b16 %v180
  %v364 = vunpack.c.l.b16 %v181
  %v365 = vunpack.c.h.b16 %v181
  %v366 = vunpack.c.l.b16 %v182
  %v367 = vunpack.c.h.b16 %v182
  %v368 = vunpack.c.l.b16 %v183
  %v369 = vunpack.c.h.b16 %v183
  %v370 = vunpack.c.l.b16 %v184
  %v371 = vunpack.c.h.b16 %v184
  %v372 = vunpack.c.l.b16 %v185
  %v373 = vunpack.c.h.b16 %v185
  %v374 = vunpack.c.l.b16 %v186
  %v375 = vunpack.c.h.b16 %v186
  %v376 = vunpack.c.l.b16 %v187
  %v377 = vunpack.c.h.b16 %v187
  %v378 = vunpack.c.l.b16 %v188
  %v379 = vunpack.c.h.b16 %v188
  %v380 = vunpack.c.l.b16 %v189
  %v381 = vunpack.c.h.b16 %v189
  %v382 = vunpack.c.l.b16 %v190
  %v383 = vunpack.c.h.b16 %v190
  %v384 = vunpack.c.l.b16 %v191
  %v385 = vunpack.c.h.b16 %v191
  %v386 = vunpack.c.l.b16 %v192
  %v387 = vunpack.c.h.b16 %v192
  %v388 = vunpack.c.l.b16 %v193
  %v389 = vunpack.c.h.b16 %v193
  %v390 = vunpack.c.l.b16 %v194
  %v391 = vunpack.c.h.b16 %v194
  %v392 = vunpack.c.l.b16 %v195
  %v393 = vunpack.c.h.b16 %v195
  %v394 = vunpack.c.l.b16 %v196
  %v395 = vunpack.c.h.b16 %v196
  %v396 = vunpack.c.l.b16 %v197
  %v397 = vunpack.c.h.b16 %v197
  %v398 = vunpack.c.l.b16 %v198
  %v399 = vunpack.c.h.b16 %v198
  %v400 = vunpack.c.l.b16 %v199
  %v401 = vunpack.c.h.b16 %v199
  %v402 = vunpack.c.l.b16 %v200
  %v403 = vunpack.c.h.b16 %v200
  %v404 = vunpack.c.l.b16 %v201
  %v405 = vunpack.c.h.b16 %v201
  %v406 = vunpack.c.l.b16 %v202
  %v407 = vunpack.c.h.b16 %v202
  %v408 = vunpack.c.l.b16 %v203
  %v409 = vunpack.c.h.b16 %v203
  %v410 = vunpack.c.l.b16 %v204
  %v411 = vunpack.c.h.b16 %v204
  %v412 = vunpack.c.l.b16 %v205
  %v413 = vunpack.c.h.b16 %v205
  %v414 = vunpack.c.l.b16 %v206
  %v415 = vunpack.c.h.b16 %v206
  %v416 = vunpack.c.l.b16 %v207
  %v417 = vunpack.c.h.b16 %v207
  %v418 = vunpack.c.l.b16 %v208
  %v419 = vunpack.c.h.b16 %v208
  %v420 = vpack.c.b16 %v294, %v292
  %v421 = vpack.c.b16 %v295, %v293
  %v422 = vpack.c.b16 %v298, %v296
  %v423 = vpack.c.b16 %v299, %v297
  %v424 = vpack.c.b16 %v302, %v300
  %v425 = vpack.c.b16 %v303, %v301
  %v426 = vpack.c.b16 %v306, %v304
  %v427 = vpack.c.b16 %v307, %v305
  %v428 = vpack.c.b16 %v310, %v308
  %v429 = vpack.c.b16 %v311, %v309
  %v430 = vpack.c.b16 %v314, %v312
  %v431 = vpack.c.b16 %v315, %v313
  %v432 = vpack.c.b16 %v318, %v316
  %v433 = vpack.c.b16 %v319, %v317
  %v434 = vpack.c.b16 %v322, %v320
  %v435 = vpack.c.b16 %v323, %v321
  %v436 = vpack.c.b16 %v326, %v324
  %v437 = vpack.c.b16 %v327, %v325
  %v438 = vpack.c.b16 %v330, %v328
  %v439 = vpack.c.b16 %v331, %v329
  %v440 = vpack.c.b16 %v334, %v332
  %v441 = vpack.c.b16 %v335, %v333
  %v442 = vpack.c.b16 %v338, %v336
  %v443 = vpack.c.b16 %v339, %v337
  %v444 = vpack.c.b16 %v342, %v340
  %v445 = vpack.c.b16 %v343, %v341
  %v446 = vpack.c.b16 %v346, %v344
  %v447 = vpack.c.b16 %v347, %v345
  %v448 = vpack.c.b16 %v350, %v348
  %v449 = vpack.c.b16 %v351, %v349
  %v450 = vpack.c.b16 %v354, %v352
  %v451 = vpack.c.b16 %v355, %v353
  %v452 = vpack.c.b16 %v358, %v356
  %v453 = vpack.c.b16 %v359, %v357
  %v454 = vpack.c.b16 %v362, %v360
  %v455 = vpack.c.b16 %v363, %v361
  %v456 = vpack.c.b16 %v366, %v364
  %v457 = vpack.c.b16 %v367, %v365
  %v458 = vpack.c.b16 %v370, %v368
  %v459 = vpack.c.b16 %v371, %v369
  %v460 = vpack.c.b16 %v374, %v372
  %v461 = vpack.c.b16 %v375, %v373
  %v462 = vpack.c.b16 %v378, %v376
  %v463 = vpack.c.b16 %v379, %v377
  %v464 = vpack.c.b16 %v382, %v380
  %v465 = vpack.c.b16 %v383, %v381
  %v466 = vpack.c.b16 %v386, %v384
  %v467 = vpack.c.b16 %v387, %v385
  %v468 = vpack.c.b16 %v390, %v388
  %v469 = vpack.c.b16 %v391, %v389
  %v470 = vpack.c.b16 %v394, %v392
  %v471 = vpack.c.b16 %v395, %v393
  %v472 = vpack.c.b16 %v398, %v396
  %v473 = vpack.c.b16 %v399, %v397
  %v474 = vpack.c.b16 %v402, %v400
  %v475 = vpack.c.b16 %v403, %v401
  %v476 = vpack.c.b16 %v406, %v404
  %v477 = vpack.c.b16 %v407, %v405
  %v478 = vpack.c.b16 %v410, %v408
  %v479 = vpack.c.b16 %v411, %v409
  %v480 = vpack.c.b16 %v414, %v412
  %v481 = vpack.c.b16 %v415, %v413
  %v482 = vpack.c.b16 %v418, %v416
  %v483 = vpack.c.b16 %v419, %v417
  %v535 = vunpack.c.l.b16 %v209
  %v536 = vunpack.c.l.b16 %v210
  %v537 = vunpack.c.l.b16 %v211
  %v538 = vunpack.c.l.b16 %v212
  %v539 = vunpack.c.l.b16 %v213
  %v540 = vunpack.c.l.b16 %v214
  %v541 = vunpack.c.l.b16 %v215
  %v542 = vunpack.c.l.b16 %v216
  %v543 = vunpack.c.l.b16 %v217
  %v544 = vunpack.c.l.b16 %v218
  %v545 = vunpack.c.l.b16 %v219
  %v546 = vunpack.c.l.b16 %v220
  %v547 = vunpack.c.l.b16 %v221
  %v548 = vunpack.c.l.b16 %v222
  %v549 = vunpack.c.l.b16 %v223
  %v550 = vunpack.c.l.b16 %v224
  %v551 = vunpack.c.l.b16 %v225
  %v552 = vunpack.c.l.b16 %v226
  %v553 = vunpack.c.l.b16 %v227
  %v554 = vpack.c.b16 %v536, %v535
  %v555 = vpack.c.b16 %v538, %v537
  %v556 = vpack.c.b16 %v540, %v539
  %v557 = vpack.c.b16 %v542, %v541
  %v558 = vpack.c.b16 %v544, %v543
  %v559 = vpack.c.b16 %v546, %v545
  %v560 = vpack.c.b16 %v548, %v547
  %v561 = vpack.c.b16 %v550, %v549
  %v562 = vpack.c.b16 %v552, %v551
  %v563 = vpack.c.b16 %v553, %v553
  %vm573 = vcmask 154624
  %v575 = vsel %vm573, %v421, 0
  %v578 = vsel %vm573, %v423, 0
  %v581 = vsel %vm573, %v425, 0
  %v584 = vsel %vm573, %v427, 0
  %v587 = vsel %vm573, %v429, 0
  %v590 = vsel %vm573, %v431, 0
  %v593 = vsel %vm573, %v433, 0
  %v596 = vsel %vm573, %v435, 0
  %v599 = vsel %vm573, %v437, 0
  %v602 = vsel %vm573, %v439, 0
  %v605 = vsel %vm573, %v441, 0
  %v608 = vsel %vm573, %v443, 0
  %v611 = vsel %vm573, %v445, 0
  %v614 = vsel %vm573, %v447, 0
  %v617 = vsel %vm573, %v449, 0
  %v620 = vsel %vm573, %v451, 0
  %v623 = vsel %vm573, %v453, 0
  %v626 = vsel %vm573, %v455, 0
  %v629 = vsel %vm573, %v457, 0
  %v632 = vsel %vm573, %v459, 0
  %v635 = vsel %vm573, %v461, 0
  %v638 = vsel %vm573, %v463, 0
  %v641 = vsel %vm573, %v465, 0
  %v644 = vsel %vm573, %v467, 0
  %v647 = vsel %vm573, %v469, 0
  %v650 = vsel %vm573, %v471, 0
  %v653 = vsel %vm573, %v473, 0
  %v656 = vsel %vm573, %v475, 0
  %v659 = vsel %vm573, %v477, 0
  %v662 = vsel %vm573, %v479, 0
  %v665 = vsel %vm573, %v481, 0
  %v668 = vsel %vm573, %v483, 0
  %vm670 = vcmask 1040384
  %vm671 = vcmask 1041408
  %v672 = vsel %vm670, 4294967295, 65535
  %v673 = vsel %vm671, %v672, 0
  %v675 = vand.u32 %v563, %v673
  %677 = vmatprep.subr.bf16.mxu0 0
  %678 = vmatpush1.bf16.msra.mxu0 %v561
  %679 = vmatprep.subr.bf16.mxu0 0
  %680 = vmatpush1.bf16.msra.mxu0 %v560
  %681 = vmatprep.subr.bf16.mxu0 0
  %682 = vmatpush1.bf16.msra.mxu0 %v559
  %683 = vmatprep.subr.bf16.mxu0 0
  %684 = vmatpush1.bf16.msra.mxu0 %v558
  %685 = vmatprep.subr.bf16.mxu0 0
  %686 = vmatpush1.bf16.msra.mxu0 %v557
  %687 = vmatprep.subr.bf16.mxu0 0
  %688 = vmatpush1.bf16.msra.mxu0 %v556
  %689 = vmatprep.subr.bf16.mxu0 0
  %690 = vmatpush1.bf16.msra.mxu0 %v555
  %691 = vmatprep.subr.bf16.mxu0 0
  %692 = vmatpush1.bf16.msra.mxu0 %v554
  %693 = vmatprep.subr.bf16.mxu0 0
  %694 = vmatpush2.bf16.msra.mxu0 0
  %695 = vmatprep.subr.bf16.mxu0 0
  %696 = vmatpush2.bf16.msra.mxu0 0
  %697 = vmatprep.subr.bf16.mxu0 0
  %698 = vmatpush2.bf16.msra.mxu0 0
  %699 = vmatprep.subr.bf16.mxu0 0
  %700 = vmatpush2.bf16.msra.mxu0 0
  %701 = vmatprep.subr.bf16.mxu0 0
  %702 = vmatpush2.bf16.msra.mxu0 0
  %703 = vmatprep.subr.bf16.mxu0 0
  %704 = vmatpush2.bf16.msra.mxu0 0
  %705 = vmatprep.subr.bf16.mxu0 0
  %706 = vmatpush2.bf16.msra.mxu0 %v675
  %707 = vmatprep.subr.bf16.mxu0 0
  %708 = vmatpush2.bf16.msra.mxu0 %v562
  %709 = vmatprep.mubr.bf16.mxu0 %v575
  %710 = vmatmul.mubr.bf16.gmra.mxu0 %v420
  %v711 = vpop.f32.mrf.mxu0
  %v712 = vadd.f32 0.0, %v711
  %v713 = vpop.f32.mrf.mxu0
  %v714 = vpop.f32.mrf.mxu0
  %v715 = vadd.f32 0.0, %v714
  %v716 = vpop.f32.mrf.mxu0
  %717 = vmatprep.mubr.bf16.mxu0 %v578
  %718 = vmatmul.mubr.bf16.gmra.mxu0 %v422
  %v719 = vpop.f32.mrf.mxu0
  %v720 = vadd.f32 0.0, %v719
  %v721 = vpop.f32.mrf.mxu0
  %v722 = vpop.f32.mrf.mxu0
  %v723 = vadd.f32 0.0, %v722
  %v724 = vpop.f32.mrf.mxu0
  %725 = vmatprep.mubr.bf16.mxu0 %v581
  %726 = vmatmul.mubr.bf16.gmra.mxu0 %v424
  %v727 = vpop.f32.mrf.mxu0
  %v728 = vadd.f32 0.0, %v727
  %v729 = vpop.f32.mrf.mxu0
  %v730 = vpop.f32.mrf.mxu0
  %v731 = vadd.f32 0.0, %v730
  %v732 = vpop.f32.mrf.mxu0
  %733 = vmatprep.mubr.bf16.mxu0 %v584
  %734 = vmatmul.mubr.bf16.gmra.mxu0 %v426
  %v735 = vpop.f32.mrf.mxu0
  %v736 = vadd.f32 0.0, %v735
  %v737 = vpop.f32.mrf.mxu0
  %v738 = vpop.f32.mrf.mxu0
  %v739 = vadd.f32 0.0, %v738
  %v740 = vpop.f32.mrf.mxu0
  %741 = vmatprep.mubr.bf16.mxu0 %v587
  %742 = vmatmul.mubr.bf16.gmra.mxu0 %v428
  %v743 = vpop.f32.mrf.mxu0
  %v744 = vadd.f32 0.0, %v743
  %v745 = vpop.f32.mrf.mxu0
  %v746 = vpop.f32.mrf.mxu0
  %v747 = vadd.f32 0.0, %v746
  %v748 = vpop.f32.mrf.mxu0
  %749 = vmatprep.mubr.bf16.mxu0 %v590
  %750 = vmatmul.mubr.bf16.gmra.mxu0 %v430
  %v751 = vpop.f32.mrf.mxu0
  %v752 = vadd.f32 0.0, %v751
  %v753 = vpop.f32.mrf.mxu0
  %v754 = vpop.f32.mrf.mxu0
  %v755 = vadd.f32 0.0, %v754
  %v756 = vpop.f32.mrf.mxu0
  %757 = vmatprep.mubr.bf16.mxu0 %v593
  %758 = vmatmul.mubr.bf16.gmra.mxu0 %v432
  %v759 = vpop.f32.mrf.mxu0
  %v760 = vadd.f32 0.0, %v759
  %v761 = vpop.f32.mrf.mxu0
  %v762 = vpop.f32.mrf.mxu0
  %v763 = vadd.f32 0.0, %v762
  %v764 = vpop.f32.mrf.mxu0
  %765 = vmatprep.mubr.bf16.mxu0 %v596
  %766 = vmatmul.mubr.bf16.gmra.mxu0 %v434
  %v767 = vpop.f32.mrf.mxu0
  %v768 = vadd.f32 0.0, %v767
  %v769 = vpop.f32.mrf.mxu0
  %v770 = vpop.f32.mrf.mxu0
  %v771 = vadd.f32 0.0, %v770
  %v772 = vpop.f32.mrf.mxu0
  %773 = vmatprep.mubr.bf16.mxu0 %v599
  %774 = vmatmul.mubr.bf16.gmra.mxu0 %v436
  %v775 = vpop.f32.mrf.mxu0
  %v776 = vadd.f32 0.0, %v775
  %v777 = vpop.f32.mrf.mxu0
  %v778 = vpop.f32.mrf.mxu0
  %v779 = vadd.f32 0.0, %v778
  %v780 = vpop.f32.mrf.mxu0
  %781 = vmatprep.mubr.bf16.mxu0 %v602
  %782 = vmatmul.mubr.bf16.gmra.mxu0 %v438
  %v783 = vpop.f32.mrf.mxu0
  %v784 = vadd.f32 0.0, %v783
  %v785 = vpop.f32.mrf.mxu0
  %v786 = vpop.f32.mrf.mxu0
  %v787 = vadd.f32 0.0, %v786
  %v788 = vpop.f32.mrf.mxu0
  %789 = vmatprep.mubr.bf16.mxu0 %v605
  %790 = vmatmul.mubr.bf16.gmra.mxu0 %v440
  %v791 = vpop.f32.mrf.mxu0
  %v792 = vadd.f32 0.0, %v791
  %v793 = vpop.f32.mrf.mxu0
  %v794 = vpop.f32.mrf.mxu0
  %v795 = vadd.f32 0.0, %v794
  %v796 = vpop.f32.mrf.mxu0
  %797 = vmatprep.mubr.bf16.mxu0 %v608
  %798 = vmatmul.mubr.bf16.gmra.mxu0 %v442
  %v799 = vpop.f32.mrf.mxu0
  %v800 = vadd.f32 0.0, %v799
  %v801 = vpop.f32.mrf.mxu0
  %v802 = vpop.f32.mrf.mxu0
  %v803 = vadd.f32 0.0, %v802
  %v804 = vpop.f32.mrf.mxu0
  %805 = vmatprep.mubr.bf16.mxu0 %v611
  %806 = vmatmul.mubr.bf16.gmra.mxu0 %v444
  %v807 = vpop.f32.mrf.mxu0
  %v808 = vadd.f32 0.0, %v807
  %v809 = vpop.f32.mrf.mxu0
  %v810 = vpop.f32.mrf.mxu0
  %v811 = vadd.f32 0.0, %v810
  %v812 = vpop.f32.mrf.mxu0
  %813 = vmatprep.mubr.bf16.mxu0 %v614
  %814 = vmatmul.mubr.bf16.gmra.mxu0 %v446
  %v815 = vpop.f32.mrf.mxu0
  %v816 = vadd.f32 0.0, %v815
  %v817 = vpop.f32.mrf.mxu0
  %v818 = vpop.f32.mrf.mxu0
  %v819 = vadd.f32 0.0, %v818
  %v820 = vpop.f32.mrf.mxu0
  %821 = vmatprep.mubr.bf16.mxu0 %v617
  %822 = vmatmul.mubr.bf16.gmra.mxu0 %v448
  %v823 = vpop.f32.mrf.mxu0
  %v824 = vadd.f32 0.0, %v823
  %v825 = vpop.f32.mrf.mxu0
  %v826 = vpop.f32.mrf.mxu0
  %v827 = vadd.f32 0.0, %v826
  %v828 = vpop.f32.mrf.mxu0
  %829 = vmatprep.mubr.bf16.mxu0 %v620
  %830 = vmatmul.mubr.bf16.gmra.mxu0 %v450
  %v831 = vpop.f32.mrf.mxu0
  %v832 = vadd.f32 0.0, %v831
  %v833 = vpop.f32.mrf.mxu0
  %v834 = vpop.f32.mrf.mxu0
  %v835 = vadd.f32 0.0, %v834
  %v836 = vpop.f32.mrf.mxu0
  %837 = vmatprep.mubr.bf16.mxu0 %v623
  %838 = vmatmul.mubr.bf16.gmra.mxu0 %v452
  %v839 = vpop.f32.mrf.mxu0
  %v840 = vadd.f32 0.0, %v839
  %v841 = vpop.f32.mrf.mxu0
  %v842 = vpop.f32.mrf.mxu0
  %v843 = vadd.f32 0.0, %v842
  %v844 = vpop.f32.mrf.mxu0
  %845 = vmatprep.mubr.bf16.mxu0 %v626
  %846 = vmatmul.mubr.bf16.gmra.mxu0 %v454
  %v847 = vpop.f32.mrf.mxu0
  %v848 = vadd.f32 0.0, %v847
  %v849 = vpop.f32.mrf.mxu0
  %v850 = vpop.f32.mrf.mxu0
  %v851 = vadd.f32 0.0, %v850
  %v852 = vpop.f32.mrf.mxu0
  %853 = vmatprep.mubr.bf16.mxu0 %v629
  %854 = vmatmul.mubr.bf16.gmra.mxu0 %v456
  %v855 = vpop.f32.mrf.mxu0
  %v856 = vadd.f32 0.0, %v855
  %v857 = vpop.f32.mrf.mxu0
  %v858 = vpop.f32.mrf.mxu0
  %v859 = vadd.f32 0.0, %v858
  %v860 = vpop.f32.mrf.mxu0
  %861 = vmatprep.mubr.bf16.mxu0 %v632
  %862 = vmatmul.mubr.bf16.gmra.mxu0 %v458
  %v863 = vpop.f32.mrf.mxu0
  %v864 = vadd.f32 0.0, %v863
  %v865 = vpop.f32.mrf.mxu0
  %v866 = vpop.f32.mrf.mxu0
  %v867 = vadd.f32 0.0, %v866
  %v868 = vpop.f32.mrf.mxu0
  %869 = vmatprep.mubr.bf16.mxu0 %v635
  %870 = vmatmul.mubr.bf16.gmra.mxu0 %v460
  %v871 = vpop.f32.mrf.mxu0
  %v872 = vadd.f32 0.0, %v871
  %v873 = vpop.f32.mrf.mxu0
  %v874 = vpop.f32.mrf.mxu0
  %v875 = vadd.f32 0.0, %v874
  %v876 = vpop.f32.mrf.mxu0
  %877 = vmatprep.mubr.bf16.mxu0 %v638
  %878 = vmatmul.mubr.bf16.gmra.mxu0 %v462
  %v879 = vpop.f32.mrf.mxu0
  %v880 = vadd.f32 0.0, %v879
  %v881 = vpop.f32.mrf.mxu0
  %v882 = vpop.f32.mrf.mxu0
  %v883 = vadd.f32 0.0, %v882
  %v884 = vpop.f32.mrf.mxu0
  %885 = vmatprep.mubr.bf16.mxu0 %v641
  %886 = vmatmul.mubr.bf16.gmra.mxu0 %v464
  %v887 = vpop.f32.mrf.mxu0
  %v888 = vadd.f32 0.0, %v887
  %v889 = vpop.f32.mrf.mxu0
  %v890 = vpop.f32.mrf.mxu0
  %v891 = vadd.f32 0.0, %v890
  %v892 = vpop.f32.mrf.mxu0
  %893 = vmatprep.mubr.bf16.mxu0 %v644
  %894 = vmatmul.mubr.bf16.gmra.mxu0 %v466
  %v895 = vpop.f32.mrf.mxu0
  %v896 = vadd.f32 0.0, %v895
  %v897 = vpop.f32.mrf.mxu0
  %v898 = vpop.f32.mrf.mxu0
  %v899 = vadd.f32 0.0, %v898
  %v900 = vpop.f32.mrf.mxu0
  %901 = vmatprep.mubr.bf16.mxu0 %v647
  %902 = vmatmul.mubr.bf16.gmra.mxu0 %v468
  %v903 = vpop.f32.mrf.mxu0
  %v904 = vadd.f32 0.0, %v903
  %v905 = vpop.f32.mrf.mxu0
  %v906 = vpop.f32.mrf.mxu0
  %v907 = vadd.f32 0.0, %v906
  %v908 = vpop.f32.mrf.mxu0
  %909 = vmatprep.mubr.bf16.mxu0 %v650
  %910 = vmatmul.mubr.bf16.gmra.mxu0 %v470
  %v911 = vpop.f32.mrf.mxu0
  %v912 = vadd.f32 0.0, %v911
  %v913 = vpop.f32.mrf.mxu0
  %v914 = vpop.f32.mrf.mxu0
  %v915 = vadd.f32 0.0, %v914
  %v916 = vpop.f32.mrf.mxu0
  %917 = vmatprep.mubr.bf16.mxu0 %v653
  %918 = vmatmul.mubr.bf16.gmra.mxu0 %v472
  %v919 = vpop.f32.mrf.mxu0
  %v920 = vadd.f32 0.0, %v919
  %v921 = vpop.f32.mrf.mxu0
  %v922 = vpop.f32.mrf.mxu0
  %v923 = vadd.f32 0.0, %v922
  %v924 = vpop.f32.mrf.mxu0
  %925 = vmatprep.mubr.bf16.mxu0 %v656
  %926 = vmatmul.mubr.bf16.gmra.mxu0 %v474
  %v927 = vpop.f32.mrf.mxu0
  %v928 = vadd.f32 0.0, %v927
  %v929 = vpop.f32.mrf.mxu0
  %v930 = vpop.f32.mrf.mxu0
  %v931 = vadd.f32 0.0, %v930
  %v932 = vpop.f32.mrf.mxu0
  %933 = vmatprep.mubr.bf16.mxu0 %v659
  %934 = vmatmul.mubr.bf16.gmra.mxu0 %v476
  %v935 = vpop.f32.mrf.mxu0
  %v936 = vadd.f32 0.0, %v935
  %v937 = vpop.f32.mrf.mxu0
  %v938 = vpop.f32.mrf.mxu0
  %v939 = vadd.f32 0.0, %v938
  %v940 = vpop.f32.mrf.mxu0
  %941 = vmatprep.mubr.bf16.mxu0 %v662
  %942 = vmatmul.mubr.bf16.gmra.mxu0 %v478
  %v943 = vpop.f32.mrf.mxu0
  %v944 = vadd.f32 0.0, %v943
  %v945 = vpop.f32.mrf.mxu0
  %v946 = vpop.f32.mrf.mxu0
  %v947 = vadd.f32 0.0, %v946
  %v948 = vpop.f32.mrf.mxu0
  %949 = vmatprep.mubr.bf16.mxu0 %v665
  %950 = vmatmul.mubr.bf16.gmra.mxu0 %v480
  %v951 = vpop.f32.mrf.mxu0
  %v952 = vadd.f32 0.0, %v951
  %v953 = vpop.f32.mrf.mxu0
  %v954 = vpop.f32.mrf.mxu0
  %v955 = vadd.f32 0.0, %v954
  %v956 = vpop.f32.mrf.mxu0
  %957 = vmatprep.mubr.bf16.mxu0 %v668
  %958 = vmatmul.mubr.bf16.gmra.mxu0 %v482
  %v959 = vpop.f32.mrf.mxu0
  %v960 = vadd.f32 0.0, %v959
  %v961 = vpop.f32.mrf.mxu0
  %v962 = vpop.f32.mrf.mxu0
  %v963 = vadd.f32 0.0, %v962
  %v964 = vpop.f32.mrf.mxu0
  %965 = vdwg.mxu0
  %v966 = vadd.f32 %v81, %v712
  %v967 = vadd.f32 %v82, %v715
  %v968 = vadd.f32 %v83, %v720
  %v969 = vadd.f32 %v84, %v723
  %v970 = vadd.f32 %v85, %v728
  %v971 = vadd.f32 %v86, %v731
  %v972 = vadd.f32 %v87, %v736
  %v973 = vadd.f32 %v88, %v739
  %v974 = vadd.f32 %v89, %v744
  %v975 = vadd.f32 %v90, %v747
  %v976 = vadd.f32 %v91, %v752
  %v977 = vadd.f32 %v92, %v755
  %v978 = vadd.f32 %v93, %v760
  %v979 = vadd.f32 %v94, %v763
  %v980 = vadd.f32 %v95, %v768
  %v981 = vadd.f32 %v96, %v771
  %v982 = vadd.f32 %v97, %v776
  %v983 = vadd.f32 %v98, %v779
  %v984 = vadd.f32 %v99, %v784
  %v985 = vadd.f32 %v100, %v787
  %v986 = vadd.f32 %v101, %v792
  %v987 = vadd.f32 %v102, %v795
  %v988 = vadd.f32 %v103, %v800
  %v989 = vadd.f32 %v104, %v803
  %v990 = vadd.f32 %v105, %v808
  %v991 = vadd.f32 %v106, %v811
  %v992 = vadd.f32 %v107, %v816
  %v993 = vadd.f32 %v108, %v819
  %v994 = vadd.f32 %v109, %v824
  %v995 = vadd.f32 %v110, %v827
  %v996 = vadd.f32 %v111, %v832
  %v997 = vadd.f32 %v112, %v835
  %v998 = vadd.f32 %v113, %v840
  %v999 = vadd.f32 %v114, %v843
  %v1000 = vadd.f32 %v115, %v848
  %v1001 = vadd.f32 %v116, %v851
  %v1002 = vadd.f32 %v117, %v856
  %v1003 = vadd.f32 %v118, %v859
  %v1004 = vadd.f32 %v119, %v864
  %v1005 = vadd.f32 %v120, %v867
  %v1006 = vadd.f32 %v121, %v872
  %v1007 = vadd.f32 %v122, %v875
  %v1008 = vadd.f32 %v123, %v880
  %v1009 = vadd.f32 %v124, %v883
  %v1010 = vadd.f32 %v125, %v888
  %v1011 = vadd.f32 %v126, %v891
  %v1012 = vadd.f32 %v127, %v896
  %v1013 = vadd.f32 %v128, %v899
  %v1014 = vadd.f32 %v129, %v904
  %v1015 = vadd.f32 %v130, %v907
  %v1016 = vadd.f32 %v131, %v912
  %v1017 = vadd.f32 %v132, %v915
  %v1018 = vadd.f32 %v133, %v920
  %v1019 = vadd.f32 %v134, %v923
  %v1020 = vadd.f32 %v135, %v928
  %v1021 = vadd.f32 %v136, %v931
  %v1022 = vadd.f32 %v137, %v936
  %v1023 = vadd.f32 %v138, %v939
  %v1024 = vadd.f32 %v139, %v944
  %v1025 = vadd.f32 %v140, %v947
  %v1026 = vadd.f32 %v141, %v952
  %v1027 = vadd.f32 %v142, %v955
  %v1028 = vadd.f32 %v143, %v960
  %v1029 = vadd.f32 %v144, %v963
  %vm1030 = vcmask 523264
  %1031 = vst.msk [vmem:[#allocation2] sm:$0xff] %vm1030, %v966
  %1032 = vst.msk [vmem:[#allocation2 + $0x8] sm:$0xff] %vm1030, %v967
  %1033 = vst.msk [vmem:[#allocation2 + $0x10] sm:$0xff] %vm1030, %v968
  %1034 = vst.msk [vmem:[#allocation2 + $0x18] sm:$0xff] %vm1030, %v969
  %1035 = vst.msk [vmem:[#allocation2 + $0x20] sm:$0xff] %vm1030, %v970
  %1036 = vst.msk [vmem:[#allocation2 + $0x28] sm:$0xff] %vm1030, %v971
  %1037 = vst.msk [vmem:[#allocation2 + $0x30] sm:$0xff] %vm1030, %v972
  %1038 = vst.msk [vmem:[#allocation2 + $0x38] sm:$0xff] %vm1030, %v973
  %1039 = vst.msk [vmem:[#allocation2 + $0x40] sm:$0xff] %vm1030, %v974
  %1040 = vst.msk [vmem:[#allocation2 + $0x48] sm:$0xff] %vm1030, %v975
  %1041 = vst.msk [vmem:[#allocation2 + $0x50] sm:$0xff] %vm1030, %v976
  %1042 = vst.msk [vmem:[#allocation2 + $0x58] sm:$0xff] %vm1030, %v977
  %1043 = vst.msk [vmem:[#allocation2 + $0x60] sm:$0xff] %vm1030, %v978
  %1044 = vst.msk [vmem:[#allocation2 + $0x68] sm:$0xff] %vm1030, %v979
  %1045 = vst.msk [vmem:[#allocation2 + $0x70] sm:$0xff] %vm1030, %v980
  %1046 = vst.msk [vmem:[#allocation2 + $0x78] sm:$0xff] %vm1030, %v981
  %1047 = vst.msk [vmem:[#allocation2 + $0x80] sm:$0xff] %vm1030, %v982
  %1048 = vst.msk [vmem:[#allocation2 + $0x88] sm:$0xff] %vm1030, %v983
  %1049 = vst.msk [vmem:[#allocation2 + $0x90] sm:$0xff] %vm1030, %v984
  %1050 = vst.msk [vmem:[#allocation2 + $0x98] sm:$0xff] %vm1030, %v985
  %1051 = vst.msk [vmem:[#allocation2 + $0xa0] sm:$0xff] %vm1030, %v986
  %1052 = vst.msk [vmem:[#allocation2 + $0xa8] sm:$0xff] %vm1030, %v987
  %1053 = vst.msk [vmem:[#allocation2 + $0xb0] sm:$0xff] %vm1030, %v988
  %1054 = vst.msk [vmem:[#allocation2 + $0xb8] sm:$0xff] %vm1030, %v989
  %1055 = vst.msk [vmem:[#allocation2 + $0xc0] sm:$0xff] %vm1030, %v990
  %1056 = vst.msk [vmem:[#allocation2 + $0xc8] sm:$0xff] %vm1030, %v991
  %1057 = vst.msk [vmem:[#allocation2 + $0xd0] sm:$0xff] %vm1030, %v992
  %1058 = vst.msk [vmem:[#allocation2 + $0xd8] sm:$0xff] %vm1030, %v993
  %1059 = vst.msk [vmem:[#allocation2 + $0xe0] sm:$0xff] %vm1030, %v994
  %1060 = vst.msk [vmem:[#allocation2 + $0xe8] sm:$0xff] %vm1030, %v995
  %1061 = vst.msk [vmem:[#allocation2 + $0xf0] sm:$0xff] %vm1030, %v996
  %1062 = vst.msk [vmem:[#allocation2 + $0xf8] sm:$0xff] %vm1030, %v997
  %1063 = vst.msk [vmem:[#allocation2 + $0x100] sm:$0xff] %vm1030, %v998
  %1064 = vst.msk [vmem:[#allocation2 + $0x108] sm:$0xff] %vm1030, %v999
  %1065 = vst.msk [vmem:[#allocation2 + $0x110] sm:$0xff] %vm1030, %v1000
  %1066 = vst.msk [vmem:[#allocation2 + $0x118] sm:$0xff] %vm1030, %v1001
  %1067 = vst.msk [vmem:[#allocation2 + $0x120] sm:$0xff] %vm1030, %v1002
  %1068 = vst.msk [vmem:[#allocation2 + $0x128] sm:$0xff] %vm1030, %v1003
  %1069 = vst.msk [vmem:[#allocation2 + $0x130] sm:$0xff] %vm1030, %v1004
  %1070 = vst.msk [vmem:[#allocation2 + $0x138] sm:$0xff] %vm1030, %v1005
  %1071 = vst.msk [vmem:[#allocation2 + $0x140] sm:$0xff] %vm1030, %v1006
  %1072 = vst.msk [vmem:[#allocation2 + $0x148] sm:$0xff] %vm1030, %v1007
  %1073 = vst.msk [vmem:[#allocation2 + $0x150] sm:$0xff] %vm1030, %v1008
  %1074 = vst.msk [vmem:[#allocation2 + $0x158] sm:$0xff] %vm1030, %v1009
  %1075 = vst.msk [vmem:[#allocation2 + $0x160] sm:$0xff] %vm1030, %v1010
  %1076 = vst.msk [vmem:[#allocation2 + $0x168] sm:$0xff] %vm1030, %v1011
  %1077 = vst.msk [vmem:[#allocation2 + $0x170] sm:$0xff] %vm1030, %v1012
  %1078 = vst.msk [vmem:[#allocation2 + $0x178] sm:$0xff] %vm1030, %v1013
  %1079 = vst.msk [vmem:[#allocation2 + $0x180] sm:$0xff] %vm1030, %v1014
  %1080 = vst.msk [vmem:[#allocation2 + $0x188] sm:$0xff] %vm1030, %v1015
  %1081 = vst.msk [vmem:[#allocation2 + $0x190] sm:$0xff] %vm1030, %v1016
  %1082 = vst.msk [vmem:[#allocation2 + $0x198] sm:$0xff] %vm1030, %v1017
  %1083 = vst.msk [vmem:[#allocation2 + $0x1a0] sm:$0xff] %vm1030, %v1018
  %1084 = vst.msk [vmem:[#allocation2 + $0x1a8] sm:$0xff] %vm1030, %v1019
  %1085 = vst.msk [vmem:[#allocation2 + $0x1b0] sm:$0xff] %vm1030, %v1020
  %1086 = vst.msk [vmem:[#allocation2 + $0x1b8] sm:$0xff] %vm1030, %v1021
  %1087 = vst.msk [vmem:[#allocation2 + $0x1c0] sm:$0xff] %vm1030, %v1022
  %1088 = vst.msk [vmem:[#allocation2 + $0x1c8] sm:$0xff] %vm1030, %v1023
  %1089 = vst.msk [vmem:[#allocation2 + $0x1d0] sm:$0xff] %vm1030, %v1024
  %1090 = vst.msk [vmem:[#allocation2 + $0x1d8] sm:$0xff] %vm1030, %v1025
  %1091 = vst.msk [vmem:[#allocation2 + $0x1e0] sm:$0xff] %vm1030, %v1026
  %1092 = vst.msk [vmem:[#allocation2 + $0x1e8] sm:$0xff] %vm1030, %v1027
  %1093 = vst.msk [vmem:[#allocation2 + $0x1f0] sm:$0xff] %vm1030, %v1028
  %1094 = vst.msk [vmem:[#allocation2 + $0x1f8] sm:$0xff] %vm1030, %v1029
  // Predicated region
  $region14: #{tpu_custom_call.1} parent=0 // pred_check
    %p1095 = pneg %p12
  $region15: #{tpu_custom_call.1} parent=0 // pred_check_branch
    %1097 = sbr.rel (%p1095) target = $region17
  $region16: #{tpu_custom_call.1} parent=0 // pred_region
    %v1098 = vld [vmem:[#allocation2] sm:$0xff]
    %v1099 = vld [vmem:[#allocation2 + $0x8] sm:$0xff]
    %v1100 = vld [vmem:[#allocation2 + $0x10] sm:$0xff]
    %v1101 = vld [vmem:[#allocation2 + $0x18] sm:$0xff]
    %v1102 = vld [vmem:[#allocation2 + $0x20] sm:$0xff]
    %v1103 = vld [vmem:[#allocation2 + $0x28] sm:$0xff]
    %v1104 = vld [vmem:[#allocation2 + $0x30] sm:$0xff]
    %v1105 = vld [vmem:[#allocation2 + $0x38] sm:$0xff]
    %v1106 = vld [vmem:[#allocation2 + $0x40] sm:$0xff]
    %v1107 = vld [vmem:[#allocation2 + $0x48] sm:$0xff]
    %v1108 = vld [vmem:[#allocation2 + $0x50] sm:$0xff]
    %v1109 = vld [vmem:[#allocation2 + $0x58] sm:$0xff]
    %v1110 = vld [vmem:[#allocation2 + $0x60] sm:$0xff]
    %v1111 = vld [vmem:[#allocation2 + $0x68] sm:$0xff]
    %v1112 = vld [vmem:[#allocation2 + $0x70] sm:$0xff]
    %v1113 = vld [vmem:[#allocation2 + $0x78] sm:$0xff]
    %v1114 = vld [vmem:[#allocation2 + $0x80] sm:$0xff]
    %v1115 = vld [vmem:[#allocation2 + $0x88] sm:$0xff]
    %v1116 = vld [vmem:[#allocation2 + $0x90] sm:$0xff]
    %v1117 = vld [vmem:[#allocation2 + $0x98] sm:$0xff]
    %v1118 = vld [vmem:[#allocation2 + $0xa0] sm:$0xff]
    %v1119 = vld [vmem:[#allocation2 + $0xa8] sm:$0xff]
    %v1120 = vld [vmem:[#allocation2 + $0xb0] sm:$0xff]
    %v1121 = vld [vmem:[#allocation2 + $0xb8] sm:$0xff]
    %v1122 = vld [vmem:[#allocation2 + $0xc0] sm:$0xff]
    %v1123 = vld [vmem:[#allocation2 + $0xc8] sm:$0xff]
    %v1124 = vld [vmem:[#allocation2 + $0xd0] sm:$0xff]
    %v1125 = vld [vmem:[#allocation2 + $0xd8] sm:$0xff]
    %v1126 = vld [vmem:[#allocation2 + $0xe0] sm:$0xff]
    %v1127 = vld [vmem:[#allocation2 + $0xe8] sm:$0xff]
    %v1128 = vld [vmem:[#allocation2 + $0xf0] sm:$0xff]
    %v1129 = vld [vmem:[#allocation2 + $0xf8] sm:$0xff]
    %v1130 = vld [vmem:[#allocation2 + $0x100] sm:$0xff]
    %v1131 = vld [vmem:[#allocation2 + $0x108] sm:$0xff]
    %v1132 = vld [vmem:[#allocation2 + $0x110] sm:$0xff]
    %v1133 = vld [vmem:[#allocation2 + $0x118] sm:$0xff]
    %v1134 = vld [vmem:[#allocation2 + $0x120] sm:$0xff]
    %v1135 = vld [vmem:[#allocation2 + $0x128] sm:$0xff]
    %v1136 = vld [vmem:[#allocation2 + $0x130] sm:$0xff]
    %v1137 = vld [vmem:[#allocation2 + $0x138] sm:$0xff]
    %v1138 = vld [vmem:[#allocation2 + $0x140] sm:$0xff]
    %v1139 = vld [vmem:[#allocation2 + $0x148] sm:$0xff]
    %v1140 = vld [vmem:[#allocation2 + $0x150] sm:$0xff]
    %v1141 = vld [vmem:[#allocation2 + $0x158] sm:$0xff]
    %v1142 = vld [vmem:[#allocation2 + $0x160] sm:$0xff]
    %v1143 = vld [vmem:[#allocation2 + $0x168] sm:$0xff]
    %v1144 = vld [vmem:[#allocation2 + $0x170] sm:$0xff]
    %v1145 = vld [vmem:[#allocation2 + $0x178] sm:$0xff]
    %v1146 = vld [vmem:[#allocation2 + $0x180] sm:$0xff]
    %v1147 = vld [vmem:[#allocation2 + $0x188] sm:$0xff]
    %v1148 = vld [vmem:[#allocation2 + $0x190] sm:$0xff]
    %v1149 = vld [vmem:[#allocation2 + $0x198] sm:$0xff]
    %v1150 = vld [vmem:[#allocation2 + $0x1a0] sm:$0xff]
    %v1151 = vld [vmem:[#allocation2 + $0x1a8] sm:$0xff]
    %v1152 = vld [vmem:[#allocation2 + $0x1b0] sm:$0xff]
    %v1153 = vld [vmem:[#allocation2 + $0x1b8] sm:$0xff]
    %v1154 = vld [vmem:[#allocation2 + $0x1c0] sm:$0xff]
    %v1155 = vld [vmem:[#allocation2 + $0x1c8] sm:$0xff]
    %v1156 = vld [vmem:[#allocation2 + $0x1d0] sm:$0xff]
    %v1157 = vld [vmem:[#allocation2 + $0x1d8] sm:$0xff]
    %v1158 = vld [vmem:[#allocation2 + $0x1e0] sm:$0xff]
    %v1159 = vld [vmem:[#allocation2 + $0x1e8] sm:$0xff]
    %v1160 = vld [vmem:[#allocation2 + $0x1f0] sm:$0xff]
    %v1161 = vld [vmem:[#allocation2 + $0x1f8] sm:$0xff]
    %v1162 = vpack.c.bf16 %v1099, %v1098
    %v1163 = vpack.c.bf16 %v1101, %v1100
    %v1164 = vpack.c.bf16 %v1103, %v1102
    %v1165 = vpack.c.bf16 %v1105, %v1104
    %v1166 = vpack.c.bf16 %v1107, %v1106
    %v1167 = vpack.c.bf16 %v1109, %v1108
    %v1168 = vpack.c.bf16 %v1111, %v1110
    %v1169 = vpack.c.bf16 %v1113, %v1112
    %v1170 = vpack.c.bf16 %v1115, %v1114
    %v1171 = vpack.c.bf16 %v1117, %v1116
    %v1172 = vpack.c.bf16 %v1119, %v1118
    %v1173 = vpack.c.bf16 %v1121, %v1120
    %v1174 = vpack.c.bf16 %v1123, %v1122
    %v1175 = vpack.c.bf16 %v1125, %v1124
    %v1176 = vpack.c.bf16 %v1127, %v1126
    %v1177 = vpack.c.bf16 %v1129, %v1128
    %v1178 = vpack.c.bf16 %v1131, %v1130
    %v1179 = vpack.c.bf16 %v1133, %v1132
    %v1180 = vpack.c.bf16 %v1135, %v1134
    %v1181 = vpack.c.bf16 %v1137, %v1136
    %v1182 = vpack.c.bf16 %v1139, %v1138
    %v1183 = vpack.c.bf16 %v1141, %v1140
    %v1184 = vpack.c.bf16 %v1143, %v1142
    %v1185 = vpack.c.bf16 %v1145, %v1144
    %v1186 = vpack.c.bf16 %v1147, %v1146
    %v1187 = vpack.c.bf16 %v1149, %v1148
    %v1188 = vpack.c.bf16 %v1151, %v1150
    %v1189 = vpack.c.bf16 %v1153, %v1152
    %v1190 = vpack.c.bf16 %v1155, %v1154
    %v1191 = vpack.c.bf16 %v1157, %v1156
    %v1192 = vpack.c.bf16 %v1159, %v1158
    %v1193 = vpack.c.bf16 %v1161, %v1160
    %v1226 = vunpack.c.l.b16 %v1162
    %v1227 = vunpack.c.h.b16 %v1162
    %v1228 = vunpack.c.l.b16 %v1163
    %v1229 = vunpack.c.h.b16 %v1163
    %v1230 = vunpack.c.l.b16 %v1164
    %v1231 = vunpack.c.h.b16 %v1164
    %v1232 = vunpack.c.l.b16 %v1165
    %v1233 = vunpack.c.h.b16 %v1165
    %v1234 = vunpack.c.l.b16 %v1166
    %v1235 = vunpack.c.h.b16 %v1166
    %v1236 = vunpack.c.l.b16 %v1167
    %v1237 = vunpack.c.h.b16 %v1167
    %v1238 = vunpack.c.l.b16 %v1168
    %v1239 = vunpack.c.h.b16 %v1168
    %v1240 = vunpack.c.l.b16 %v1169
    %v1241 = vunpack.c.h.b16 %v1169
    %v1242 = vunpack.c.l.b16 %v1170
    %v1243 = vunpack.c.h.b16 %v1170
    %v1244 = vunpack.c.l.b16 %v1171
    %v1245 = vunpack.c.h.b16 %v1171
    %v1246 = vunpack.c.l.b16 %v1172
    %v1247 = vunpack.c.h.b16 %v1172
    %v1248 = vunpack.c.l.b16 %v1173
    %v1249 = vunpack.c.h.b16 %v1173
    %v1250 = vunpack.c.l.b16 %v1174
    %v1251 = vunpack.c.h.b16 %v1174
    %v1252 = vunpack.c.l.b16 %v1175
    %v1253 = vunpack.c.h.b16 %v1175
    %v1254 = vunpack.c.l.b16 %v1176
    %v1255 = vunpack.c.h.b16 %v1176
    %v1256 = vunpack.c.l.b16 %v1177
    %v1257 = vunpack.c.h.b16 %v1177
    %v1258 = vunpack.c.l.b16 %v1178
    %v1259 = vunpack.c.h.b16 %v1178
    %v1260 = vunpack.c.l.b16 %v1179
    %v1261 = vunpack.c.h.b16 %v1179
    %v1262 = vunpack.c.l.b16 %v1180
    %v1263 = vunpack.c.h.b16 %v1180
    %v1264 = vunpack.c.l.b16 %v1181
    %v1265 = vunpack.c.h.b16 %v1181
    %v1266 = vunpack.c.l.b16 %v1182
    %v1267 = vunpack.c.h.b16 %v1182
    %v1268 = vunpack.c.l.b16 %v1183
    %v1269 = vunpack.c.h.b16 %v1183
    %v1270 = vunpack.c.l.b16 %v1184
    %v1271 = vunpack.c.h.b16 %v1184
    %v1272 = vunpack.c.l.b16 %v1185
    %v1273 = vunpack.c.h.b16 %v1185
    %v1274 = vunpack.c.l.b16 %v1186
    %v1275 = vunpack.c.h.b16 %v1186
    %v1276 = vunpack.c.l.b16 %v1187
    %v1277 = vunpack.c.h.b16 %v1187
    %v1278 = vunpack.c.l.b16 %v1188
    %v1279 = vunpack.c.h.b16 %v1188
    %v1280 = vunpack.c.l.b16 %v1189
    %v1281 = vunpack.c.h.b16 %v1189
    %v1282 = vunpack.c.l.b16 %v1190
    %v1283 = vunpack.c.h.b16 %v1190
    %v1284 = vunpack.c.l.b16 %v1191
    %v1285 = vunpack.c.h.b16 %v1191
    %v1286 = vunpack.c.l.b16 %v1192
    %v1287 = vunpack.c.h.b16 %v1192
    %v1288 = vunpack.c.l.b16 %v1193
    %v1289 = vunpack.c.h.b16 %v1193
    %v1290 = vpack.c.b16 %v1226, %v1226
    %v1291 = vpack.c.b16 %v1227, %v1227
    %v1292 = vpack.c.b16 %v1228, %v1228
    %v1293 = vpack.c.b16 %v1229, %v1229
    %v1294 = vpack.c.b16 %v1230, %v1230
    %v1295 = vpack.c.b16 %v1231, %v1231
    %v1296 = vpack.c.b16 %v1232, %v1232
    %v1297 = vpack.c.b16 %v1233, %v1233
    %v1298 = vpack.c.b16 %v1234, %v1234
    %v1299 = vpack.c.b16 %v1235, %v1235
    %v1300 = vpack.c.b16 %v1236, %v1236
    %v1301 = vpack.c.b16 %v1237, %v1237
    %v1302 = vpack.c.b16 %v1238, %v1238
    %v1303 = vpack.c.b16 %v1239, %v1239
    %v1304 = vpack.c.b16 %v1240, %v1240
    %v1305 = vpack.c.b16 %v1241, %v1241
    %v1306 = vpack.c.b16 %v1242, %v1242
    %v1307 = vpack.c.b16 %v1243, %v1243
    %v1308 = vpack.c.b16 %v1244, %v1244
    %v1309 = vpack.c.b16 %v1245, %v1245
    %v1310 = vpack.c.b16 %v1246, %v1246
    %v1311 = vpack.c.b16 %v1247, %v1247
    %v1312 = vpack.c.b16 %v1248, %v1248
    %v1313 = vpack.c.b16 %v1249, %v1249
    %v1314 = vpack.c.b16 %v1250, %v1250
    %v1315 = vpack.c.b16 %v1251, %v1251
    %v1316 = vpack.c.b16 %v1252, %v1252
    %v1317 = vpack.c.b16 %v1253, %v1253
    %v1318 = vpack.c.b16 %v1254, %v1254
    %v1319 = vpack.c.b16 %v1255, %v1255
    %v1320 = vpack.c.b16 %v1256, %v1256
    %v1321 = vpack.c.b16 %v1257, %v1257
    %v1322 = vpack.c.b16 %v1258, %v1258
    %v1323 = vpack.c.b16 %v1259, %v1259
    %v1324 = vpack.c.b16 %v1260, %v1260
    %v1325 = vpack.c.b16 %v1261, %v1261
    %v1326 = vpack.c.b16 %v1262, %v1262
    %v1327 = vpack.c.b16 %v1263, %v1263
    %v1328 = vpack.c.b16 %v1264, %v1264
    %v1329 = vpack.c.b16 %v1265, %v1265
    %v1330 = vpack.c.b16 %v1266, %v1266
    %v1331 = vpack.c.b16 %v1267, %v1267
    %v1332 = vpack.c.b16 %v1268, %v1268
    %v1333 = vpack.c.b16 %v1269, %v1269
    %v1334 = vpack.c.b16 %v1270, %v1270
    %v1335 = vpack.c.b16 %v1271, %v1271
    %v1336 = vpack.c.b16 %v1272, %v1272
    %v1337 = vpack.c.b16 %v1273, %v1273
    %v1338 = vpack.c.b16 %v1274, %v1274
    %v1339 = vpack.c.b16 %v1275, %v1275
    %v1340 = vpack.c.b16 %v1276, %v1276
    %v1341 = vpack.c.b16 %v1277, %v1277
    %v1342 = vpack.c.b16 %v1278, %v1278
    %v1343 = vpack.c.b16 %v1279, %v1279
    %v1344 = vpack.c.b16 %v1280, %v1280
    %v1345 = vpack.c.b16 %v1281, %v1281
    %v1346 = vpack.c.b16 %v1282, %v1282
    %v1347 = vpack.c.b16 %v1283, %v1283
    %v1348 = vpack.c.b16 %v1284, %v1284
    %v1349 = vpack.c.b16 %v1285, %v1285
    %v1350 = vpack.c.b16 %v1286, %v1286
    %v1351 = vpack.c.b16 %v1287, %v1287
    %v1352 = vpack.c.b16 %v1288, %v1288
    %v1353 = vpack.c.b16 %v1289, %v1289
    %vm1418 = vcmask 519168
    %1419 = vst.msk [vmem:[%s2] sm:$0xf] %vm1418, %v1290
    %1420 = vst.msk [vmem:[%s2 + $0x4] sm:$0xf] %vm1418, %v1291
    %1421 = vst.msk [vmem:[%s2 + $0x8] sm:$0xf] %vm1418, %v1292
    %1422 = vst.msk [vmem:[%s2 + $0xc] sm:$0xf] %vm1418, %v1293
    %1423 = vst.msk [vmem:[%s2 + $0x10] sm:$0xf] %vm1418, %v1294
    %1424 = vst.msk [vmem:[%s2 + $0x14] sm:$0xf] %vm1418, %v1295
    %1425 = vst.msk [vmem:[%s2 + $0x18] sm:$0xf] %vm1418, %v1296
    %1426 = vst.msk [vmem:[%s2 + $0x1c] sm:$0xf] %vm1418, %v1297
    %1427 = vst.msk [vmem:[%s2 + $0x20] sm:$0xf] %vm1418, %v1298
    %1428 = vst.msk [vmem:[%s2 + $0x24] sm:$0xf] %vm1418, %v1299
    %1429 = vst.msk [vmem:[%s2 + $0x28] sm:$0xf] %vm1418, %v1300
    %1430 = vst.msk [vmem:[%s2 + $0x2c] sm:$0xf] %vm1418, %v1301
    %1431 = vst.msk [vmem:[%s2 + $0x30] sm:$0xf] %vm1418, %v1302
    %1432 = vst.msk [vmem:[%s2 + $0x34] sm:$0xf] %vm1418, %v1303
    %1433 = vst.msk [vmem:[%s2 + $0x38] sm:$0xf] %vm1418, %v1304
    %1434 = vst.msk [vmem:[%s2 + $0x3c] sm:$0xf] %vm1418, %v1305
    %1435 = vst.msk [vmem:[%s2 + $0x40] sm:$0xf] %vm1418, %v1306
    %1436 = vst.msk [vmem:[%s2 + $0x44] sm:$0xf] %vm1418, %v1307
    %1437 = vst.msk [vmem:[%s2 + $0x48] sm:$0xf] %vm1418, %v1308
    %1438 = vst.msk [vmem:[%s2 + $0x4c] sm:$0xf] %vm1418, %v1309
    %1439 = vst.msk [vmem:[%s2 + $0x50] sm:$0xf] %vm1418, %v1310
    %1440 = vst.msk [vmem:[%s2 + $0x54] sm:$0xf] %vm1418, %v1311
    %1441 = vst.msk [vmem:[%s2 + $0x58] sm:$0xf] %vm1418, %v1312
    %1442 = vst.msk [vmem:[%s2 + $0x5c] sm:$0xf] %vm1418, %v1313
    %1443 = vst.msk [vmem:[%s2 + $0x60] sm:$0xf] %vm1418, %v1314
    %1444 = vst.msk [vmem:[%s2 + $0x64] sm:$0xf] %vm1418, %v1315
    %1445 = vst.msk [vmem:[%s2 + $0x68] sm:$0xf] %vm1418, %v1316
    %1446 = vst.msk [vmem:[%s2 + $0x6c] sm:$0xf] %vm1418, %v1317
    %1447 = vst.msk [vmem:[%s2 + $0x70] sm:$0xf] %vm1418, %v1318
    %1448 = vst.msk [vmem:[%s2 + $0x74] sm:$0xf] %vm1418, %v1319
    %1449 = vst.msk [vmem:[%s2 + $0x78] sm:$0xf] %vm1418, %v1320
    %1450 = vst.msk [vmem:[%s2 + $0x7c] sm:$0xf] %vm1418, %v1321
    %1451 = vst.msk [vmem:[%s2 + $0x80] sm:$0xf] %vm1418, %v1322
    %1452 = vst.msk [vmem:[%s2 + $0x84] sm:$0xf] %vm1418, %v1323
    %1453 = vst.msk [vmem:[%s2 + $0x88] sm:$0xf] %vm1418, %v1324
    %1454 = vst.msk [vmem:[%s2 + $0x8c] sm:$0xf] %vm1418, %v1325
    %1455 = vst.msk [vmem:[%s2 + $0x90] sm:$0xf] %vm1418, %v1326
    %1456 = vst.msk [vmem:[%s2 + $0x94] sm:$0xf] %vm1418, %v1327
    %1457 = vst.msk [vmem:[%s2 + $0x98] sm:$0xf] %vm1418, %v1328
    %1458 = vst.msk [vmem:[%s2 + $0x9c] sm:$0xf] %vm1418, %v1329
    %1459 = vst.msk [vmem:[%s2 + $0xa0] sm:$0xf] %vm1418, %v1330
    %1460 = vst.msk [vmem:[%s2 + $0xa4] sm:$0xf] %vm1418, %v1331
    %1461 = vst.msk [vmem:[%s2 + $0xa8] sm:$0xf] %vm1418, %v1332
    %1462 = vst.msk [vmem:[%s2 + $0xac] sm:$0xf] %vm1418, %v1333
    %1463 = vst.msk [vmem:[%s2 + $0xb0] sm:$0xf] %vm1418, %v1334
    %1464 = vst.msk [vmem:[%s2 + $0xb4] sm:$0xf] %vm1418, %v1335
    %1465 = vst.msk [vmem:[%s2 + $0xb8] sm:$0xf] %vm1418, %v1336
    %1466 = vst.msk [vmem:[%s2 + $0xbc] sm:$0xf] %vm1418, %v1337
    %1467 = vst.msk [vmem:[%s2 + $0xc0] sm:$0xf] %vm1418, %v1338
    %1468 = vst.msk [vmem:[%s2 + $0xc4] sm:$0xf] %vm1418, %v1339
    %1469 = vst.msk [vmem:[%s2 + $0xc8] sm:$0xf] %vm1418, %v1340
    %1470 = vst.msk [vmem:[%s2 + $0xcc] sm:$0xf] %vm1418, %v1341
    %1471 = vst.msk [vmem:[%s2 + $0xd0] sm:$0xf] %vm1418, %v1342
    %1472 = vst.msk [vmem:[%s2 + $0xd4] sm:$0xf] %vm1418, %v1343
    %1473 = vst.msk [vmem:[%s2 + $0xd8] sm:$0xf] %vm1418, %v1344
    %1474 = vst.msk [vmem:[%s2 + $0xdc] sm:$0xf] %vm1418, %v1345
    %1475 = vst.msk [vmem:[%s2 + $0xe0] sm:$0xf] %vm1418, %v1346
    %1476 = vst.msk [vmem:[%s2 + $0xe4] sm:$0xf] %vm1418, %v1347
    %1477 = vst.msk [vmem:[%s2 + $0xe8] sm:$0xf] %vm1418, %v1348
    %1478 = vst.msk [vmem:[%s2 + $0xec] sm:$0xf] %vm1418, %v1349
    %1479 = vst.msk [vmem:[%s2 + $0xf0] sm:$0xf] %vm1418, %v1350
    %1480 = vst.msk [vmem:[%s2 + $0xf4] sm:$0xf] %vm1418, %v1351
    %1481 = vst.msk [vmem:[%s2 + $0xf8] sm:$0xf] %vm1418, %v1352
    %1482 = vst.msk [vmem:[%s2 + $0xfc] sm:$0xf] %vm1418, %v1353
  $region17: #{tpu_custom_call.1} parent=0 // pred_fallthru
    _
  // Predicated region
  $region18: #{tpu_custom_call.1} parent=0 // pred_check
    _
  $region19: #{tpu_custom_call.1} parent=0 // pred_check_branch
    %1484 = sbr.rel (0) target = $region21
  $region20: #{tpu_custom_call.1} parent=0 // pred_region
    _
  $region21: #{tpu_custom_call.1} parent=0 // pred_fallthru
    _
  // Predicated region
  $region22: #{tpu_custom_call.1} parent=0 // pred_check
    _
  $region23: #{tpu_custom_call.1} parent=0 // pred_check_branch
    %1486 = sbr.rel (0) target = $region25
  $region24: #{tpu_custom_call.1} parent=0 // pred_region
    _
  $region25: #{tpu_custom_call.1} parent=0 // pred_fallthru
    _

</llo_original>
